<compile_context>
chip_gen: v5e
topology: v5e:2x2
jax: 0.10.0
libtpu: 0.0.40
codegen_flags: <defaults>
</compile_context>

<pallas_src>
import jax
import jax.numpy as jnp
from jax import lax
from jax.experimental import pallas as pl
from jax.experimental.pallas import tpu as pltpu


# ---------------------------------------------------------------------------
# Fused Pallas kernel:
#   conv3x3(+fused bias, ReLU) -> NCHW flatten -> feat @ V -> (.) @ V^T
# ---------------------------------------------------------------------------
def fused_feature_kernel(p_ref, w_ref, v_ref, vt_ref, o_ref):
    """One batch block per grid step.

    p_ref : (bb, C_in*9+1, H*W) f32  im2col patches (+ ones row for bias)
    w_ref : (C_out, C_in*9+1)   f32  conv weights with bias column appended
    v_ref : (F, K)              bf16 eigen vectors
    vt_ref: (K, F)              bf16 eigen vectors, pre-transposed in wrapper
    o_ref : (bb, F)             f32  projected features
    """
    bb = p_ref.shape[0]
    c_out = w_ref.shape[0]

    # Conv (+ fused bias) + ReLU, one lane-dense (C_out, HW) tile per element.
    rows = []
    for b in range(bb):                          # static unroll, bb is small
        conv = jnp.dot(w_ref[...], p_ref[b], preferred_element_type=jnp.float32)
        conv = jnp.maximum(conv, 0.0)            # (C_out, HW), bias already in
        # NCHW flatten (channel-major) done as static sublane slices + lane
        # concat (avoids relying on a sublane->lane reshape relayout).
        rows.append(jnp.concatenate([conv[c:c + 1, :] for c in range(c_out)],
                                    axis=1))                        # (1, F)
    feat = rows[0] if bb == 1 else jnp.concatenate(rows, axis=0)    # (bb, F)

    # t = feat @ V : single K=2048 contraction, M=bb, bf16 operands, f32 acc.
    t = jnp.dot(feat.astype(jnp.bfloat16), v_ref[...],
                preferred_element_type=jnp.float32)                 # (bb, K)
    # out = t @ V^T : V^T passed pre-transposed -> MXU-native (K, N) layout.
    out = jnp.dot(t.astype(jnp.bfloat16), vt_ref[...],
                  preferred_element_type=jnp.float32)               # (bb, F)
    o_ref[...] = out


# ---------------------------------------------------------------------------
# Wrapper (im2col layout glue is plain JAX; all compute is in the kernel)
# ---------------------------------------------------------------------------
def feature_extractor_forward(x, params):
    """Mirrors FeatureExtractor.forward: backbone feature -> @V @ V.T."""
    conv_w = params["conv_w"]        # (C_out, C_in, 3, 3)
    conv_b = params["conv_b"]        # (C_out,)
    v = params["eigen_vectors"]      # (F, K)

    B, C, H, W = x.shape
    C_out = conv_w.shape[0]
    HW = H * W
    KD = C * 9
    F = C_out * HW
    K = v.shape[1]

    # Batch block: whole batch if small, else blocks of 8 (keeps >=2 parallel
    # grid steps for real batch sizes -> both v7x TensorCores busy).
    bb = B if (B <= 8 or B % 8 != 0) else 8
    nb = B // bb

    # --- im2col layout glue (lane-dense: last dim = H*W); ones row fuses bias.
    xp = jnp.pad(x, ((0, 0), (0, 0), (1, 1), (1, 1)))
    taps = [xp[:, :, dy:dy + H, dx:dx + W] for dy in range(3) for dx in range(3)]
    patches = jnp.stack(taps, axis=2).reshape(B, KD, HW)              # (B, C*9, HW)
    patches = jnp.concatenate(
        [patches, jnp.ones((B, 1, HW), patches.dtype)], axis=1)       # (B, KD+1, HW)
    w_aug = jnp.concatenate(
        [conv_w.reshape(C_out, KD), conv_b.reshape(C_out, 1)], axis=1)  # (C_out, KD+1)

    # Eigen matrix in both orientations, bf16 (one-time transpose/cast in XLA).
    v_bf = v.astype(jnp.bfloat16)                                     # (F, K)
    vt_bf = v.T.astype(jnp.bfloat16)                                  # (K, F)

    out = pl.pallas_call(
        fused_feature_kernel,
        out_shape=jax.ShapeDtypeStruct((B, F), jnp.float32),
        grid=(nb,),
        in_specs=[
            pl.BlockSpec((bb, KD + 1, HW), lambda i: (i, 0, 0)),
            pl.BlockSpec((C_out, KD + 1), lambda i: (0, 0)),
            pl.BlockSpec((F, K), lambda i: (0, 0)),   # V    VMEM-resident
            pl.BlockSpec((K, F), lambda i: (0, 0)),   # V^T  VMEM-resident
        ],
        out_specs=pl.BlockSpec((bb, F), lambda i: (i, 0)),
        compiler_params=pltpu.CompilerParams(dimension_semantics=("parallel",)),
    )(patches, w_aug, v_bf, vt_bf)
    return out


# ---------------------------------------------------------------------------
# Main
# ---------------------------------------------------------------------------
if __name__ == "__main__":
    B, C_in, H, W = 2, 4, 16, 16
    C_out = 8
    F = C_out * H * W          # 2048 flattened feature dim
    K = 128                    # number of eigen vectors

    key = jax.random.PRNGKey(0)
    k_x, k_cw, k_cb, k_ev = jax.random.split(key, 4)

    x = jax.random.normal(k_x, (B, C_in, H, W), dtype=jnp.float32)
    params = {
        "conv_w": jax.random.normal(k_cw, (C_out, C_in, 3, 3), dtype=jnp.float32) * 0.1,
        "conv_b": jax.random.normal(k_cb, (C_out,), dtype=jnp.float32) * 0.1,
        "eigen_vectors": jax.random.normal(k_ev, (F, K), dtype=jnp.float32) * 0.02,
    }

    out = jax.jit(feature_extractor_forward)(x, params)
    jax.block_until_ready(out)
    assert out.shape == (B, F) and out.dtype == jnp.float32

    # Pure-JAX reference sanity check (f32).
    def reference(x, p):
        feat = lax.conv_general_dilated(
            x, p["conv_w"], window_strides=(1, 1), padding="SAME",
            dimension_numbers=("NCHW", "OIHW", "NCHW"))
        feat = jax.nn.relu(feat + p["conv_b"][None, :, None, None])
        feat = feat.reshape(x.shape[0], -1)
        return feat @ p["eigen_vectors"] @ p["eigen_vectors"].T

    ref = reference(x, params)
    assert jnp.allclose(out, ref, rtol=2e-2, atol=2e-2), float(jnp.max(jnp.abs(out - ref)))
    print("KERNEL_OK")
</pallas_src>

<mosaic_0001>
module attributes {stable_mosaic.version = 11 : i64} {
  func.func @fused_feature_kernel(%arg0: i32, %arg1: memref<2x37x256xf32, #tpu.memory_space<vmem>>, %arg2: memref<8x37xf32, #tpu.memory_space<vmem>>, %arg3: memref<2048x128xbf16, #tpu.memory_space<vmem>>, %arg4: memref<128x2048xbf16, #tpu.memory_space<vmem>>, %arg5: memref<2x2048xf32, #tpu.memory_space<vmem>>) attributes {dimension_semantics = [#tpu.dimension_semantics<parallel>], iteration_bounds = array<i64: 1>, scalar_prefetch = 0 : i64, scratch_operands = 0 : i64, tpu.core_type = #tpu.core_type<tc>, window_params = [{transform_indices = @transform_0, window_bounds = array<i64: 2, 37, 256>}, {pipeline_mode = #tpu.pipeline_mode<synchronous>, transform_indices = @transform_1, window_bounds = array<i64: 8, 37>}, {pipeline_mode = #tpu.pipeline_mode<synchronous>, transform_indices = @transform_2, window_bounds = array<i64: 2048, 128>}, {pipeline_mode = #tpu.pipeline_mode<synchronous>, transform_indices = @transform_3, window_bounds = array<i64: 128, 2048>}, {transform_indices = @transform_4, window_bounds = array<i64: 2, 2048>}]} {
    %c0 = arith.constant 0 : index
    %c0_0 = arith.constant 0 : index
    %0 = vector.load %arg2[%c0, %c0_0] : memref<8x37xf32, #tpu.memory_space<vmem>>, vector<8x37xf32>
    %c0_1 = arith.constant 0 : index
    %c0_2 = arith.constant 0 : index
    %c0_3 = arith.constant 0 : index
    %1 = vector.load %arg1[%c0_1, %c0_2, %c0_3] : memref<2x37x256xf32, #tpu.memory_space<vmem>>, vector<1x37x256xf32>
    %2 = vector.shape_cast %1 : vector<1x37x256xf32> to vector<37x256xf32>
    %cst = arith.constant dense<0.000000e+00> : vector<8x256xf32>
    %3 = tpu.matmul %0, %2, %cst {dimension_numbers = #tpu.dot_dimension_numbers<[1], [0], [0], [1], [0, 0, 1, 1], [], []>} : vector<8x37xf32>, vector<37x256xf32>, vector<8x256xf32> -> vector<8x256xf32>
    %cst_4 = arith.constant 0.000000e+00 : f32
    %4 = vector.broadcast %cst_4 : f32 to vector<8x256xf32>
    %5 = arith.maximumf %3, %4 : vector<8x256xf32>
    %6 = vector.extract_strided_slice %5 {offsets = [0, 0], sizes = [1, 256], strides = [1, 1]} : vector<8x256xf32> to vector<1x256xf32>
    %7 = vector.extract_strided_slice %5 {offsets = [1, 0], sizes = [1, 256], strides = [1, 1]} : vector<8x256xf32> to vector<1x256xf32>
    %8 = vector.extract_strided_slice %5 {offsets = [2, 0], sizes = [1, 256], strides = [1, 1]} : vector<8x256xf32> to vector<1x256xf32>
    %9 = vector.extract_strided_slice %5 {offsets = [3, 0], sizes = [1, 256], strides = [1, 1]} : vector<8x256xf32> to vector<1x256xf32>
    %10 = vector.extract_strided_slice %5 {offsets = [4, 0], sizes = [1, 256], strides = [1, 1]} : vector<8x256xf32> to vector<1x256xf32>
    %11 = vector.extract_strided_slice %5 {offsets = [5, 0], sizes = [1, 256], strides = [1, 1]} : vector<8x256xf32> to vector<1x256xf32>
    %12 = vector.extract_strided_slice %5 {offsets = [6, 0], sizes = [1, 256], strides = [1, 1]} : vector<8x256xf32> to vector<1x256xf32>
    %13 = vector.extract_strided_slice %5 {offsets = [7, 0], sizes = [1, 256], strides = [1, 1]} : vector<8x256xf32> to vector<1x256xf32>
    %14 = tpu.concatenate %6, %7, %8, %9, %10, %11, %12, %13 in 1 : vector<1x256xf32>, vector<1x256xf32>, vector<1x256xf32>, vector<1x256xf32>, vector<1x256xf32>, vector<1x256xf32>, vector<1x256xf32>, vector<1x256xf32> -> vector<1x2048xf32>
    %c0_5 = arith.constant 0 : index
    %c0_6 = arith.constant 0 : index
    %15 = vector.load %arg2[%c0_5, %c0_6] : memref<8x37xf32, #tpu.memory_space<vmem>>, vector<8x37xf32>
    %c1 = arith.constant 1 : index
    %c0_7 = arith.constant 0 : index
    %c0_8 = arith.constant 0 : index
    %16 = vector.load %arg1[%c1, %c0_7, %c0_8] : memref<2x37x256xf32, #tpu.memory_space<vmem>>, vector<1x37x256xf32>
    %17 = vector.shape_cast %16 : vector<1x37x256xf32> to vector<37x256xf32>
    %cst_9 = arith.constant dense<0.000000e+00> : vector<8x256xf32>
    %18 = tpu.matmul %15, %17, %cst_9 {dimension_numbers = #tpu.dot_dimension_numbers<[1], [0], [0], [1], [0, 0, 1, 1], [], []>} : vector<8x37xf32>, vector<37x256xf32>, vector<8x256xf32> -> vector<8x256xf32>
    %cst_10 = arith.constant 0.000000e+00 : f32
    %19 = vector.broadcast %cst_10 : f32 to vector<8x256xf32>
    %20 = arith.maximumf %18, %19 : vector<8x256xf32>
    %21 = vector.extract_strided_slice %20 {offsets = [0, 0], sizes = [1, 256], strides = [1, 1]} : vector<8x256xf32> to vector<1x256xf32>
    %22 = vector.extract_strided_slice %20 {offsets = [1, 0], sizes = [1, 256], strides = [1, 1]} : vector<8x256xf32> to vector<1x256xf32>
    %23 = vector.extract_strided_slice %20 {offsets = [2, 0], sizes = [1, 256], strides = [1, 1]} : vector<8x256xf32> to vector<1x256xf32>
    %24 = vector.extract_strided_slice %20 {offsets = [3, 0], sizes = [1, 256], strides = [1, 1]} : vector<8x256xf32> to vector<1x256xf32>
    %25 = vector.extract_strided_slice %20 {offsets = [4, 0], sizes = [1, 256], strides = [1, 1]} : vector<8x256xf32> to vector<1x256xf32>
    %26 = vector.extract_strided_slice %20 {offsets = [5, 0], sizes = [1, 256], strides = [1, 1]} : vector<8x256xf32> to vector<1x256xf32>
    %27 = vector.extract_strided_slice %20 {offsets = [6, 0], sizes = [1, 256], strides = [1, 1]} : vector<8x256xf32> to vector<1x256xf32>
    %28 = vector.extract_strided_slice %20 {offsets = [7, 0], sizes = [1, 256], strides = [1, 1]} : vector<8x256xf32> to vector<1x256xf32>
    %29 = tpu.concatenate %21, %22, %23, %24, %25, %26, %27, %28 in 1 : vector<1x256xf32>, vector<1x256xf32>, vector<1x256xf32>, vector<1x256xf32>, vector<1x256xf32>, vector<1x256xf32>, vector<1x256xf32>, vector<1x256xf32> -> vector<1x2048xf32>
    %30 = tpu.concatenate %14, %29 in 0 : vector<1x2048xf32>, vector<1x2048xf32> -> vector<2x2048xf32>
    %31 = arith.truncf %30 : vector<2x2048xf32> to vector<2x2048xbf16>
    %c0_11 = arith.constant 0 : index
    %c0_12 = arith.constant 0 : index
    %32 = vector.load %arg3[%c0_11, %c0_12] : memref<2048x128xbf16, #tpu.memory_space<vmem>>, vector<2048x128xbf16>
    %cst_13 = arith.constant dense<0.000000e+00> : vector<2x128xf32>
    %33 = tpu.matmul %31, %32, %cst_13 {dimension_numbers = #tpu.dot_dimension_numbers<[1], [0], [0], [1], [0, 0, 1, 1], [], []>} : vector<2x2048xbf16>, vector<2048x128xbf16>, vector<2x128xf32> -> vector<2x128xf32>
    %34 = arith.truncf %33 : vector<2x128xf32> to vector<2x128xbf16>
    %c0_14 = arith.constant 0 : index
    %c0_15 = arith.constant 0 : index
    %35 = vector.load %arg4[%c0_14, %c0_15] : memref<128x2048xbf16, #tpu.memory_space<vmem>>, vector<128x2048xbf16>
    %cst_16 = arith.constant dense<0.000000e+00> : vector<2x2048xf32>
    %36 = tpu.matmul %34, %35, %cst_16 {dimension_numbers = #tpu.dot_dimension_numbers<[1], [0], [0], [1], [0, 0, 1, 1], [], []>} : vector<2x128xbf16>, vector<128x2048xbf16>, vector<2x2048xf32> -> vector<2x2048xf32>
    %c0_17 = arith.constant 0 : index
    %c0_18 = arith.constant 0 : index
    %37 = vector.load %arg5[%c0_17, %c0_18] : memref<2x2048xf32, #tpu.memory_space<vmem>>, vector<2x2048xf32>
    tpu.vector_store %arg5[%c0_17, %c0_18], %36 {strides = array<i32>} : memref<2x2048xf32, #tpu.memory_space<vmem>>, vector<2x2048xf32>,
    return
  }
  func.func @transform_0(%arg0: i32) -> (i32, i32, i32) {
    %c0_i32 = arith.constant 0 : i32
    %c0_i32_0 = arith.constant 0 : i32
    %c0_i32_1 = arith.constant 0 : i32
    return %arg0, %c0_i32, %c0_i32_0 : i32, i32, i32
  }
  func.func @transform_1(%arg0: i32) -> (i32, i32) {
    %c0_i32 = arith.constant 0 : i32
    %c0_i32_0 = arith.constant 0 : i32
    %c0_i32_1 = arith.constant 0 : i32
    return %c0_i32, %c0_i32_0 : i32, i32
  }
  func.func @transform_2(%arg0: i32) -> (i32, i32) {
    %c0_i32 = arith.constant 0 : i32
    %c0_i32_0 = arith.constant 0 : i32
    %c0_i32_1 = arith.constant 0 : i32
    return %c0_i32, %c0_i32_0 : i32, i32
  }
  func.func @transform_3(%arg0: i32) -> (i32, i32) {
    %c0_i32 = arith.constant 0 : i32
    %c0_i32_0 = arith.constant 0 : i32
    %c0_i32_1 = arith.constant 0 : i32
    return %c0_i32, %c0_i32_0 : i32, i32
  }
  func.func @transform_4(%arg0: i32) -> (i32, i32) {
    %c0_i32 = arith.constant 0 : i32
    %c0_i32_0 = arith.constant 0 : i32
    return %arg0, %c0_i32 : i32, i32
  }
}

</mosaic_0001>

<llo_original>
// kernel: feature_extractor_forward.1
$region0: #{feature_extractor_forward.1}
  #allocation0 [shape = 'u32[]', space=smem, size = 0x4, offset = 0x4, fixed_abs, tag = 'smem constant byte address 0x4 - core index']
  #allocation1 [shape = 'u32[72,128]{1,0:T(1,128)}', space=vmem, size = 0x9000, scoped, tag = 'internal scratch']
  %s0 = inlined_call_operand.vmem [shape: f32[2,37,256], index: 0, kind: input, shape index: {}]
  %s1 = inlined_call_operand.vmem [shape: f32[8,37], index: 1, kind: input, shape index: {}]
  %s2 = inlined_call_operand.vmem [shape: bf16[2048,128], index: 2, kind: input, shape index: {}]
  %s3 = inlined_call_operand.vmem [shape: bf16[128,2048], index: 3, kind: input, shape index: {}]
  %s4 = inlined_call_operand.hbm [shape: f32[2,2048], index: 4, kind: output, shape index: {}]
  %s5 = sld [smem:[#allocation0]]
  $region26: #{feature_extractor_forward.1} parent=0
    _
  %s7 = ssub.s32 1, %s5
  %s8 = scalar_select 0, %s7, %s5
  $region1: #{feature_extractor_forward.1} parent=0
    #allocation2 [shape = 'u8[16384]{0}', space=vmem, size = 0x4000, scoped, tag = 'output window, operand 0, single buffered']
    #allocation3 [shape = 's32[1]{0}', space=sflag, size = 0x4, scoped, tag = 'scoped memory for feature_extractor_forward.1']
    %9 = vsyncpa [#allocation3], 0
    // Predicated region
    $region2: #{feature_extractor_forward.1} parent=1 // pred_check
      _
    $region3: #{feature_extractor_forward.1} parent=1 // pred_check_branch
      %11 = sbr.rel (0) target = $region5
    $region4: #{feature_extractor_forward.1} parent=1 // pred_region
      _
    $region5: #{feature_extractor_forward.1} parent=1 // pred_fallthru
      _
    // Predicated region
    $region6: #{feature_extractor_forward.1} parent=1 // pred_check
      _
    $region7: #{feature_extractor_forward.1} parent=1 // pred_check_branch
      %13 = sbr.rel (0) target = $region9
    $region8: #{feature_extractor_forward.1} parent=1 // pred_region
      _
    $region9: #{feature_extractor_forward.1} parent=1 // pred_fallthru
      _
    // Predicated region
    $region10: #{feature_extractor_forward.1} parent=1 // pred_check
      _
    $region11: #{feature_extractor_forward.1} parent=1 // pred_check_branch
      %15 = sbr.rel (0) target = $region13
    $region12: #{feature_extractor_forward.1} parent=1 // pred_region
      _
    $region13: #{feature_extractor_forward.1} parent=1 // pred_fallthru
      _
    // Predicated region
    $region14: #{feature_extractor_forward.1} parent=1 // pred_check
      _
    $region15: #{feature_extractor_forward.1} parent=1 // pred_check_branch
      %17 = sbr.rel (0) target = $region17
    $region16: #{feature_extractor_forward.1} parent=1 // pred_region
      _
    $region17: #{feature_extractor_forward.1} parent=1 // pred_fallthru
      _
    %v18 = vld [vmem:[%s1] sm:$0xff]
    %v19 = vld [vmem:[%s0] sm:$0xff]
    %v20 = vld [vmem:[%s0 + $0x8] sm:$0xff]
    %v21 = vld [vmem:[%s0 + $0x10] sm:$0xff]
    %v22 = vld [vmem:[%s0 + $0x18] sm:$0xff]
    %v23 = vld [vmem:[%s0 + $0x20] sm:$0xff]
    %v24 = vld [vmem:[%s0 + $0x28] sm:$0xff]
    %v25 = vld [vmem:[%s0 + $0x30] sm:$0xff]
    %v26 = vld [vmem:[%s0 + $0x38] sm:$0xff]
    %v27 = vld [vmem:[%s0 + $0x40] sm:$0x1f]
    %v28 = vld [vmem:[%s0 + $0x48] sm:$0x1f]
    %vm29 = vcmask 302080
    %v31 = vsel %vm29, %v18, 0
    %vm33 = vcmask 1044480
    %v35 = vsel %vm33, %v27, 0
    %v38 = vsel %vm33, %v28, 0
    %40 = vmatpush.msra.mxu0 0.0
    %41 = vmatpush.msra.mxu0 0.0
    %42 = vmatpush.msra.mxu0 0.0
    %43 = vmatpush.msra.mxu0 0.0
    %44 = vmatpush.msra.mxu0 0.0
    %45 = vmatpush.msra.mxu0 0.0
    %46 = vmatpush.msra.mxu0 0.0
    %47 = vmatpush.msra.mxu0 0.0
    %48 = vmatpush.msra.mxu0 0.0
    %49 = vmatpush.msra.mxu0 0.0
    %50 = vmatpush.msra.mxu0 0.0
    %51 = vmatpush.msra.mxu0 %v35
    %52 = vmatpush.msra.mxu0 %v25
    %53 = vmatpush.msra.mxu0 %v23
    %54 = vmatpush.msra.mxu0 %v21
    %55 = vmatpush.msra.mxu0 %v19
    %56 = vmatmul.f32.gmra.mxu0 %v31
    %v57 = vpop.f32.mrf.mxu0
    %v58 = vadd.f32 0.0, %v57
    %59 = vdwg.mxu0
    %60 = vmatpush.msra.mxu0 0.0
    %61 = vmatpush.msra.mxu0 0.0
    %62 = vmatpush.msra.mxu0 0.0
    %63 = vmatpush.msra.mxu0 0.0
    %64 = vmatpush.msra.mxu0 0.0
    %65 = vmatpush.msra.mxu0 0.0
    %66 = vmatpush.msra.mxu0 0.0
    %67 = vmatpush.msra.mxu0 0.0
    %68 = vmatpush.msra.mxu0 0.0
    %69 = vmatpush.msra.mxu0 0.0
    %70 = vmatpush.msra.mxu0 0.0
    %71 = vmatpush.msra.mxu0 %v38
    %72 = vmatpush.msra.mxu0 %v26
    %73 = vmatpush.msra.mxu0 %v24
    %74 = vmatpush.msra.mxu0 %v22
    %75 = vmatpush.msra.mxu0 %v20
    %76 = vmatmul.f32.gmra.mxu0 %v31
    %v77 = vpop.f32.mrf.mxu0
    %v78 = vadd.f32 0.0, %v77
    %79 = vdwg.mxu0
    %v80 = vmax.f32 %v58, 0.0
    %v81 = vmax.f32 %v78, 0.0
    %v84 = vrot.slane %v80, 1
    %v85 = vrot.slane %v81, 1
    %v88 = vrot.slane %v80, 2
    %v89 = vrot.slane %v81, 2
    %v92 = vrot.slane %v80, 3
    %v93 = vrot.slane %v81, 3
    %v96 = vrot.slane %v80, 4
    %v97 = vrot.slane %v81, 4
    %v100 = vrot.slane %v80, 5
    %v101 = vrot.slane %v81, 5
    %v104 = vrot.slane %v80, 6
    %v105 = vrot.slane %v81, 6
    %v108 = vrot.slane %v80, 7
    %v109 = vrot.slane %v81, 7
    %s112 = scalar_lea.vmem %s0, 80
    %v113 = vld [vmem:[%s112] sm:$0xff]
    %v114 = vld [vmem:[%s112 + $0x8] sm:$0xff]
    %v115 = vld [vmem:[%s112 + $0x10] sm:$0xff]
    %v116 = vld [vmem:[%s112 + $0x18] sm:$0xff]
    %v117 = vld [vmem:[%s112 + $0x20] sm:$0xff]
    %v118 = vld [vmem:[%s112 + $0x28] sm:$0xff]
    %v119 = vld [vmem:[%s112 + $0x30] sm:$0xff]
    %v120 = vld [vmem:[%s112 + $0x38] sm:$0xff]
    %v121 = vld [vmem:[%s112 + $0x40] sm:$0x1f]
    %v122 = vld [vmem:[%s112 + $0x48] sm:$0x1f]
    %v124 = vsel %vm33, %v121, 0
    %v127 = vsel %vm33, %v122, 0
    %129 = vmatpush.msra.mxu0 0.0
    %130 = vmatpush.msra.mxu0 0.0
    %131 = vmatpush.msra.mxu0 0.0
    %132 = vmatpush.msra.mxu0 0.0
    %133 = vmatpush.msra.mxu0 0.0
    %134 = vmatpush.msra.mxu0 0.0
    %135 = vmatpush.msra.mxu0 0.0
    %136 = vmatpush.msra.mxu0 0.0
    %137 = vmatpush.msra.mxu0 0.0
    %138 = vmatpush.msra.mxu0 0.0
    %139 = vmatpush.msra.mxu0 0.0
    %140 = vmatpush.msra.mxu0 %v124
    %141 = vmatpush.msra.mxu0 %v119
    %142 = vmatpush.msra.mxu0 %v117
    %143 = vmatpush.msra.mxu0 %v115
    %144 = vmatpush.msra.mxu0 %v113
    %145 = vmatmul.f32.gmra.mxu0 %v31
    %v146 = vpop.f32.mrf.mxu0
    %v147 = vadd.f32 0.0, %v146
    %148 = vdwg.mxu0
    %149 = vmatpush.msra.mxu0 0.0
    %150 = vmatpush.msra.mxu0 0.0
    %151 = vmatpush.msra.mxu0 0.0
    %152 = vmatpush.msra.mxu0 0.0
    %153 = vmatpush.msra.mxu0 0.0
    %154 = vmatpush.msra.mxu0 0.0
    %155 = vmatpush.msra.mxu0 0.0
    %156 = vmatpush.msra.mxu0 0.0
    %157 = vmatpush.msra.mxu0 0.0
    %158 = vmatpush.msra.mxu0 0.0
    %159 = vmatpush.msra.mxu0 0.0
    %160 = vmatpush.msra.mxu0 %v127
    %161 = vmatpush.msra.mxu0 %v120
    %162 = vmatpush.msra.mxu0 %v118
    %163 = vmatpush.msra.mxu0 %v116
    %164 = vmatpush.msra.mxu0 %v114
    %165 = vmatmul.f32.gmra.mxu0 %v31
    %v166 = vpop.f32.mrf.mxu0
    %v167 = vadd.f32 0.0, %v166
    %168 = vdwg.mxu0
    %v169 = vmax.f32 %v147, 0.0
    %v170 = vmax.f32 %v167, 0.0
    %v173 = vrot.slane %v169, 1
    %v174 = vrot.slane %v170, 1
    %v175 = vrot.slane %v169, 2
    %v176 = vrot.slane %v170, 2
    %v177 = vrot.slane %v169, 3
    %v178 = vrot.slane %v170, 3
    %v179 = vrot.slane %v169, 4
    %v180 = vrot.slane %v170, 4
    %v181 = vrot.slane %v169, 5
    %v182 = vrot.slane %v170, 5
    %v183 = vrot.slane %v169, 6
    %v184 = vrot.slane %v170, 6
    %v185 = vrot.slane %v169, 7
    %v186 = vrot.slane %v170, 7
    %v187 = vrot.slane %v173, 7
    %v188 = vrot.slane %v174, 7
    %v189 = vrot.slane %v175, 7
    %v190 = vrot.slane %v176, 7
    %v191 = vrot.slane %v177, 7
    %v192 = vrot.slane %v178, 7
    %v193 = vrot.slane %v179, 7
    %v194 = vrot.slane %v180, 7
    %v195 = vrot.slane %v181, 7
    %v196 = vrot.slane %v182, 7
    %v197 = vrot.slane %v183, 7
    %v198 = vrot.slane %v184, 7
    %v199 = vrot.slane %v185, 7
    %v200 = vrot.slane %v186, 7
    %vm217 = vcmask 1040384
    %v218 = vsel %vm217, %v80, %v185
    %v219 = vsel %vm217, %v81, %v186
    %v220 = vsel %vm217, %v84, %v187
    %v221 = vsel %vm217, %v85, %v188
    %v222 = vsel %vm217, %v88, %v189
    %v223 = vsel %vm217, %v89, %v190
    %v224 = vsel %vm217, %v92, %v191
    %v225 = vsel %vm217, %v93, %v192
    %v226 = vsel %vm217, %v96, %v193
    %v227 = vsel %vm217, %v97, %v194
    %v228 = vsel %vm217, %v100, %v195
    %v229 = vsel %vm217, %v101, %v196
    %v230 = vsel %vm217, %v104, %v197
    %v231 = vsel %vm217, %v105, %v198
    %v232 = vsel %vm217, %v108, %v199
    %v233 = vsel %vm217, %v109, %v200
    %v234 = vpack.c.bf16 %v218, %v218
    %v235 = vpack.c.bf16 %v219, %v219
    %v236 = vpack.c.bf16 %v220, %v220
    %v237 = vpack.c.bf16 %v221, %v221
    %v238 = vpack.c.bf16 %v222, %v222
    %v239 = vpack.c.bf16 %v223, %v223
    %v240 = vpack.c.bf16 %v224, %v224
    %v241 = vpack.c.bf16 %v225, %v225
    %v242 = vpack.c.bf16 %v226, %v226
    %v243 = vpack.c.bf16 %v227, %v227
    %v244 = vpack.c.bf16 %v228, %v228
    %v245 = vpack.c.bf16 %v229, %v229
    %v246 = vpack.c.bf16 %v230, %v230
    %v247 = vpack.c.bf16 %v231, %v231
    %v248 = vpack.c.bf16 %v232, %v232
    %v249 = vpack.c.bf16 %v233, %v233
    %v250 = vld [vmem:[%s2] sm:$0xf]
    %v251 = vld [vmem:[%s2 + $0x4] sm:$0xf]
    %v252 = vld [vmem:[%s2 + $0x8] sm:$0xf]
    %v253 = vld [vmem:[%s2 + $0xc] sm:$0xf]
    %v254 = vld [vmem:[%s2 + $0x10] sm:$0xf]
    %v255 = vld [vmem:[%s2 + $0x14] sm:$0xf]
    %v256 = vld [vmem:[%s2 + $0x18] sm:$0xf]
    %v257 = vld [vmem:[%s2 + $0x1c] sm:$0xf]
    %v258 = vld [vmem:[%s2 + $0x20] sm:$0xf]
    %v259 = vld [vmem:[%s2 + $0x24] sm:$0xf]
    %v260 = vld [vmem:[%s2 + $0x28] sm:$0xf]
    %v261 = vld [vmem:[%s2 + $0x2c] sm:$0xf]
    %v262 = vld [vmem:[%s2 + $0x30] sm:$0xf]
    %v263 = vld [vmem:[%s2 + $0x34] sm:$0xf]
    %v264 = vld [vmem:[%s2 + $0x38] sm:$0xf]
    %v265 = vld [vmem:[%s2 + $0x3c] sm:$0xf]
    %v266 = vld [vmem:[%s2 + $0x40] sm:$0xf]
    %v267 = vld [vmem:[%s2 + $0x44] sm:$0xf]
    %v268 = vld [vmem:[%s2 + $0x48] sm:$0xf]
    %v269 = vld [vmem:[%s2 + $0x4c] sm:$0xf]
    %v270 = vld [vmem:[%s2 + $0x50] sm:$0xf]
    %v271 = vld [vmem:[%s2 + $0x54] sm:$0xf]
    %v272 = vld [vmem:[%s2 + $0x58] sm:$0xf]
    %v273 = vld [vmem:[%s2 + $0x5c] sm:$0xf]
    %v274 = vld [vmem:[%s2 + $0x60] sm:$0xf]
    %v275 = vld [vmem:[%s2 + $0x64] sm:$0xf]
    %v276 = vld [vmem:[%s2 + $0x68] sm:$0xf]
    %v277 = vld [vmem:[%s2 + $0x6c] sm:$0xf]
    %v278 = vld [vmem:[%s2 + $0x70] sm:$0xf]
    %v279 = vld [vmem:[%s2 + $0x74] sm:$0xf]
    %v280 = vld [vmem:[%s2 + $0x78] sm:$0xf]
    %v281 = vld [vmem:[%s2 + $0x7c] sm:$0xf]
    %v282 = vld [vmem:[%s2 + $0x80] sm:$0xf]
    %v283 = vld [vmem:[%s2 + $0x84] sm:$0xf]
    %v284 = vld [vmem:[%s2 + $0x88] sm:$0xf]
    %v285 = vld [vmem:[%s2 + $0x8c] sm:$0xf]
    %v286 = vld [vmem:[%s2 + $0x90] sm:$0xf]
    %v287 = vld [vmem:[%s2 + $0x94] sm:$0xf]
    %v288 = vld [vmem:[%s2 + $0x98] sm:$0xf]
    %v289 = vld [vmem:[%s2 + $0x9c] sm:$0xf]
    %v290 = vld [vmem:[%s2 + $0xa0] sm:$0xf]
    %v291 = vld [vmem:[%s2 + $0xa4] sm:$0xf]
    %v292 = vld [vmem:[%s2 + $0xa8] sm:$0xf]
    %v293 = vld [vmem:[%s2 + $0xac] sm:$0xf]
    %v294 = vld [vmem:[%s2 + $0xb0] sm:$0xf]
    %v295 = vld [vmem:[%s2 + $0xb4] sm:$0xf]
    %v296 = vld [vmem:[%s2 + $0xb8] sm:$0xf]
    %v297 = vld [vmem:[%s2 + $0xbc] sm:$0xf]
    %v298 = vld [vmem:[%s2 + $0xc0] sm:$0xf]
    %v299 = vld [vmem:[%s2 + $0xc4] sm:$0xf]
    %v300 = vld [vmem:[%s2 + $0xc8] sm:$0xf]
    %v301 = vld [vmem:[%s2 + $0xcc] sm:$0xf]
    %v302 = vld [vmem:[%s2 + $0xd0] sm:$0xf]
    %v303 = vld [vmem:[%s2 + $0xd4] sm:$0xf]
    %v304 = vld [vmem:[%s2 + $0xd8] sm:$0xf]
    %v305 = vld [vmem:[%s2 + $0xdc] sm:$0xf]
    %v306 = vld [vmem:[%s2 + $0xe0] sm:$0xf]
    %v307 = vld [vmem:[%s2 + $0xe4] sm:$0xf]
    %v308 = vld [vmem:[%s2 + $0xe8] sm:$0xf]
    %v309 = vld [vmem:[%s2 + $0xec] sm:$0xf]
    %v310 = vld [vmem:[%s2 + $0xf0] sm:$0xf]
    %v311 = vld [vmem:[%s2 + $0xf4] sm:$0xf]
    %v312 = vld [vmem:[%s2 + $0xf8] sm:$0xf]
    %v313 = vld [vmem:[%s2 + $0xfc] sm:$0xf]
    %v314 = vld [vmem:[%s2 + $0x100] sm:$0xf]
    %v315 = vld [vmem:[%s2 + $0x104] sm:$0xf]
    %v316 = vld [vmem:[%s2 + $0x108] sm:$0xf]
    %v317 = vld [vmem:[%s2 + $0x10c] sm:$0xf]
    %v318 = vld [vmem:[%s2 + $0x110] sm:$0xf]
    %v319 = vld [vmem:[%s2 + $0x114] sm:$0xf]
    %v320 = vld [vmem:[%s2 + $0x118] sm:$0xf]
    %v321 = vld [vmem:[%s2 + $0x11c] sm:$0xf]
    %v322 = vld [vmem:[%s2 + $0x120] sm:$0xf]
    %v323 = vld [vmem:[%s2 + $0x124] sm:$0xf]
    %v324 = vld [vmem:[%s2 + $0x128] sm:$0xf]
    %v325 = vld [vmem:[%s2 + $0x12c] sm:$0xf]
    %v326 = vld [vmem:[%s2 + $0x130] sm:$0xf]
    %v327 = vld [vmem:[%s2 + $0x134] sm:$0xf]
    %v328 = vld [vmem:[%s2 + $0x138] sm:$0xf]
    %v329 = vld [vmem:[%s2 + $0x13c] sm:$0xf]
    %v330 = vld [vmem:[%s2 + $0x140] sm:$0xf]
    %v331 = vld [vmem:[%s2 + $0x144] sm:$0xf]
    %v332 = vld [vmem:[%s2 + $0x148] sm:$0xf]
    %v333 = vld [vmem:[%s2 + $0x14c] sm:$0xf]
    %v334 = vld [vmem:[%s2 + $0x150] sm:$0xf]
    %v335 = vld [vmem:[%s2 + $0x154] sm:$0xf]
    %v336 = vld [vmem:[%s2 + $0x158] sm:$0xf]
    %v337 = vld [vmem:[%s2 + $0x15c] sm:$0xf]
    %v338 = vld [vmem:[%s2 + $0x160] sm:$0xf]
    %v339 = vld [vmem:[%s2 + $0x164] sm:$0xf]
    %v340 = vld [vmem:[%s2 + $0x168] sm:$0xf]
    %v341 = vld [vmem:[%s2 + $0x16c] sm:$0xf]
    %v342 = vld [vmem:[%s2 + $0x170] sm:$0xf]
    %v343 = vld [vmem:[%s2 + $0x174] sm:$0xf]
    %v344 = vld [vmem:[%s2 + $0x178] sm:$0xf]
    %v345 = vld [vmem:[%s2 + $0x17c] sm:$0xf]
    %v346 = vld [vmem:[%s2 + $0x180] sm:$0xf]
    %v347 = vld [vmem:[%s2 + $0x184] sm:$0xf]
    %v348 = vld [vmem:[%s2 + $0x188] sm:$0xf]
    %v349 = vld [vmem:[%s2 + $0x18c] sm:$0xf]
    %v350 = vld [vmem:[%s2 + $0x190] sm:$0xf]
    %v351 = vld [vmem:[%s2 + $0x194] sm:$0xf]
    %v352 = vld [vmem:[%s2 + $0x198] sm:$0xf]
    %v353 = vld [vmem:[%s2 + $0x19c] sm:$0xf]
    %v354 = vld [vmem:[%s2 + $0x1a0] sm:$0xf]
    %v355 = vld [vmem:[%s2 + $0x1a4] sm:$0xf]
    %v356 = vld [vmem:[%s2 + $0x1a8] sm:$0xf]
    %v357 = vld [vmem:[%s2 + $0x1ac] sm:$0xf]
    %v358 = vld [vmem:[%s2 + $0x1b0] sm:$0xf]
    %v359 = vld [vmem:[%s2 + $0x1b4] sm:$0xf]
    %v360 = vld [vmem:[%s2 + $0x1b8] sm:$0xf]
    %v361 = vld [vmem:[%s2 + $0x1bc] sm:$0xf]
    %v362 = vld [vmem:[%s2 + $0x1c0] sm:$0xf]
    %v363 = vld [vmem:[%s2 + $0x1c4] sm:$0xf]
    %v364 = vld [vmem:[%s2 + $0x1c8] sm:$0xf]
    %v365 = vld [vmem:[%s2 + $0x1cc] sm:$0xf]
    %v366 = vld [vmem:[%s2 + $0x1d0] sm:$0xf]
    %v367 = vld [vmem:[%s2 + $0x1d4] sm:$0xf]
    %v368 = vld [vmem:[%s2 + $0x1d8] sm:$0xf]
    %v369 = vld [vmem:[%s2 + $0x1dc] sm:$0xf]
    %v370 = vld [vmem:[%s2 + $0x1e0] sm:$0xf]
    %v371 = vld [vmem:[%s2 + $0x1e4] sm:$0xf]
    %v372 = vld [vmem:[%s2 + $0x1e8] sm:$0xf]
    %v373 = vld [vmem:[%s2 + $0x1ec] sm:$0xf]
    %v374 = vld [vmem:[%s2 + $0x1f0] sm:$0xf]
    %v375 = vld [vmem:[%s2 + $0x1f4] sm:$0xf]
    %v376 = vld [vmem:[%s2 + $0x1f8] sm:$0xf]
    %v377 = vld [vmem:[%s2 + $0x1fc] sm:$0xf]
    %v378 = vld [vmem:[%s2 + $0x200] sm:$0xf]
    %v379 = vld [vmem:[%s2 + $0x204] sm:$0xf]
    %v380 = vld [vmem:[%s2 + $0x208] sm:$0xf]
    %v381 = vld [vmem:[%s2 + $0x20c] sm:$0xf]
    %v382 = vld [vmem:[%s2 + $0x210] sm:$0xf]
    %v383 = vld [vmem:[%s2 + $0x214] sm:$0xf]
    %v384 = vld [vmem:[%s2 + $0x218] sm:$0xf]
    %v385 = vld [vmem:[%s2 + $0x21c] sm:$0xf]
    %v386 = vld [vmem:[%s2 + $0x220] sm:$0xf]
    %v387 = vld [vmem:[%s2 + $0x224] sm:$0xf]
    %v388 = vld [vmem:[%s2 + $0x228] sm:$0xf]
    %v389 = vld [vmem:[%s2 + $0x22c] sm:$0xf]
    %v390 = vld [vmem:[%s2 + $0x230] sm:$0xf]
    %v391 = vld [vmem:[%s2 + $0x234] sm:$0xf]
    %v392 = vld [vmem:[%s2 + $0x238] sm:$0xf]
    %v393 = vld [vmem:[%s2 + $0x23c] sm:$0xf]
    %v394 = vld [vmem:[%s2 + $0x240] sm:$0xf]
    %v395 = vld [vmem:[%s2 + $0x244] sm:$0xf]
    %v396 = vld [vmem:[%s2 + $0x248] sm:$0xf]
    %v397 = vld [vmem:[%s2 + $0x24c] sm:$0xf]
    %v398 = vld [vmem:[%s2 + $0x250] sm:$0xf]
    %v399 = vld [vmem:[%s2 + $0x254] sm:$0xf]
    %v400 = vld [vmem:[%s2 + $0x258] sm:$0xf]
    %v401 = vld [vmem:[%s2 + $0x25c] sm:$0xf]
    %v402 = vld [vmem:[%s2 + $0x260] sm:$0xf]
    %v403 = vld [vmem:[%s2 + $0x264] sm:$0xf]
    %v404 = vld [vmem:[%s2 + $0x268] sm:$0xf]
    %v405 = vld [vmem:[%s2 + $0x26c] sm:$0xf]
    %v406 = vld [vmem:[%s2 + $0x270] sm:$0xf]
    %v407 = vld [vmem:[%s2 + $0x274] sm:$0xf]
    %v408 = vld [vmem:[%s2 + $0x278] sm:$0xf]
    %v409 = vld [vmem:[%s2 + $0x27c] sm:$0xf]
    %v410 = vld [vmem:[%s2 + $0x280] sm:$0xf]
    %v411 = vld [vmem:[%s2 + $0x284] sm:$0xf]
    %v412 = vld [vmem:[%s2 + $0x288] sm:$0xf]
    %v413 = vld [vmem:[%s2 + $0x28c] sm:$0xf]
    %v414 = vld [vmem:[%s2 + $0x290] sm:$0xf]
    %v415 = vld [vmem:[%s2 + $0x294] sm:$0xf]
    %v416 = vld [vmem:[%s2 + $0x298] sm:$0xf]
    %v417 = vld [vmem:[%s2 + $0x29c] sm:$0xf]
    %v418 = vld [vmem:[%s2 + $0x2a0] sm:$0xf]
    %v419 = vld [vmem:[%s2 + $0x2a4] sm:$0xf]
    %v420 = vld [vmem:[%s2 + $0x2a8] sm:$0xf]
    %v421 = vld [vmem:[%s2 + $0x2ac] sm:$0xf]
    %v422 = vld [vmem:[%s2 + $0x2b0] sm:$0xf]
    %v423 = vld [vmem:[%s2 + $0x2b4] sm:$0xf]
    %v424 = vld [vmem:[%s2 + $0x2b8] sm:$0xf]
    %v425 = vld [vmem:[%s2 + $0x2bc] sm:$0xf]
    %v426 = vld [vmem:[%s2 + $0x2c0] sm:$0xf]
    %v427 = vld [vmem:[%s2 + $0x2c4] sm:$0xf]
    %v428 = vld [vmem:[%s2 + $0x2c8] sm:$0xf]
    %v429 = vld [vmem:[%s2 + $0x2cc] sm:$0xf]
    %v430 = vld [vmem:[%s2 + $0x2d0] sm:$0xf]
    %v431 = vld [vmem:[%s2 + $0x2d4] sm:$0xf]
    %v432 = vld [vmem:[%s2 + $0x2d8] sm:$0xf]
    %v433 = vld [vmem:[%s2 + $0x2dc] sm:$0xf]
    %v434 = vld [vmem:[%s2 + $0x2e0] sm:$0xf]
    %v435 = vld [vmem:[%s2 + $0x2e4] sm:$0xf]
    %v436 = vld [vmem:[%s2 + $0x2e8] sm:$0xf]
    %v437 = vld [vmem:[%s2 + $0x2ec] sm:$0xf]
    %v438 = vld [vmem:[%s2 + $0x2f0] sm:$0xf]
    %v439 = vld [vmem:[%s2 + $0x2f4] sm:$0xf]
    %v440 = vld [vmem:[%s2 + $0x2f8] sm:$0xf]
    %v441 = vld [vmem:[%s2 + $0x2fc] sm:$0xf]
    %v442 = vld [vmem:[%s2 + $0x300] sm:$0xf]
    %v443 = vld [vmem:[%s2 + $0x304] sm:$0xf]
    %v444 = vld [vmem:[%s2 + $0x308] sm:$0xf]
    %v445 = vld [vmem:[%s2 + $0x30c] sm:$0xf]
    %v446 = vld [vmem:[%s2 + $0x310] sm:$0xf]
    %v447 = vld [vmem:[%s2 + $0x314] sm:$0xf]
    %v448 = vld [vmem:[%s2 + $0x318] sm:$0xf]
    %v449 = vld [vmem:[%s2 + $0x31c] sm:$0xf]
    %v450 = vld [vmem:[%s2 + $0x320] sm:$0xf]
    %v451 = vld [vmem:[%s2 + $0x324] sm:$0xf]
    %v452 = vld [vmem:[%s2 + $0x328] sm:$0xf]
    %v453 = vld [vmem:[%s2 + $0x32c] sm:$0xf]
    %v454 = vld [vmem:[%s2 + $0x330] sm:$0xf]
    %v455 = vld [vmem:[%s2 + $0x334] sm:$0xf]
    %v456 = vld [vmem:[%s2 + $0x338] sm:$0xf]
    %v457 = vld [vmem:[%s2 + $0x33c] sm:$0xf]
    %v458 = vld [vmem:[%s2 + $0x340] sm:$0xf]
    %v459 = vld [vmem:[%s2 + $0x344] sm:$0xf]
    %v460 = vld [vmem:[%s2 + $0x348] sm:$0xf]
    %v461 = vld [vmem:[%s2 + $0x34c] sm:$0xf]
    %v462 = vld [vmem:[%s2 + $0x350] sm:$0xf]
    %v463 = vld [vmem:[%s2 + $0x354] sm:$0xf]
    %v464 = vld [vmem:[%s2 + $0x358] sm:$0xf]
    %v465 = vld [vmem:[%s2 + $0x35c] sm:$0xf]
    %v466 = vld [vmem:[%s2 + $0x360] sm:$0xf]
    %v467 = vld [vmem:[%s2 + $0x364] sm:$0xf]
    %v468 = vld [vmem:[%s2 + $0x368] sm:$0xf]
    %v469 = vld [vmem:[%s2 + $0x36c] sm:$0xf]
    %v470 = vld [vmem:[%s2 + $0x370] sm:$0xf]
    %v471 = vld [vmem:[%s2 + $0x374] sm:$0xf]
    %v472 = vld [vmem:[%s2 + $0x378] sm:$0xf]
    %v473 = vld [vmem:[%s2 + $0x37c] sm:$0xf]
    %v474 = vld [vmem:[%s2 + $0x380] sm:$0xf]
    %v475 = vld [vmem:[%s2 + $0x384] sm:$0xf]
    %v476 = vld [vmem:[%s2 + $0x388] sm:$0xf]
    %v477 = vld [vmem:[%s2 + $0x38c] sm:$0xf]
    %v478 = vld [vmem:[%s2 + $0x390] sm:$0xf]
    %v479 = vld [vmem:[%s2 + $0x394] sm:$0xf]
    %v480 = vld [vmem:[%s2 + $0x398] sm:$0xf]
    %v481 = vld [vmem:[%s2 + $0x39c] sm:$0xf]
    %v482 = vld [vmem:[%s2 + $0x3a0] sm:$0xf]
    %v483 = vld [vmem:[%s2 + $0x3a4] sm:$0xf]
    %v484 = vld [vmem:[%s2 + $0x3a8] sm:$0xf]
    %v485 = vld [vmem:[%s2 + $0x3ac] sm:$0xf]
    %v486 = vld [vmem:[%s2 + $0x3b0] sm:$0xf]
    %v487 = vld [vmem:[%s2 + $0x3b4] sm:$0xf]
    %v488 = vld [vmem:[%s2 + $0x3b8] sm:$0xf]
    %v489 = vld [vmem:[%s2 + $0x3bc] sm:$0xf]
    %v490 = vld [vmem:[%s2 + $0x3c0] sm:$0xf]
    %v491 = vld [vmem:[%s2 + $0x3c4] sm:$0xf]
    %v492 = vld [vmem:[%s2 + $0x3c8] sm:$0xf]
    %v493 = vld [vmem:[%s2 + $0x3cc] sm:$0xf]
    %v494 = vld [vmem:[%s2 + $0x3d0] sm:$0xf]
    %v495 = vld [vmem:[%s2 + $0x3d4] sm:$0xf]
    %v496 = vld [vmem:[%s2 + $0x3d8] sm:$0xf]
    %v497 = vld [vmem:[%s2 + $0x3dc] sm:$0xf]
    %v498 = vld [vmem:[%s2 + $0x3e0] sm:$0xf]
    %v499 = vld [vmem:[%s2 + $0x3e4] sm:$0xf]
    %v500 = vld [vmem:[%s2 + $0x3e8] sm:$0xf]
    %v501 = vld [vmem:[%s2 + $0x3ec] sm:$0xf]
    %v502 = vld [vmem:[%s2 + $0x3f0] sm:$0xf]
    %v503 = vld [vmem:[%s2 + $0x3f4] sm:$0xf]
    %v504 = vld [vmem:[%s2 + $0x3f8] sm:$0xf]
    %v505 = vld [vmem:[%s2 + $0x3fc] sm:$0xf]
    %v762 = vunpack.c.l.b16 %v250
    %v763 = vunpack.c.l.b16 %v251
    %v764 = vunpack.c.l.b16 %v252
    %v765 = vunpack.c.l.b16 %v253
    %v766 = vunpack.c.l.b16 %v254
    %v767 = vunpack.c.l.b16 %v255
    %v768 = vunpack.c.l.b16 %v256
    %v769 = vunpack.c.l.b16 %v257
    %v770 = vunpack.c.l.b16 %v258
    %v771 = vunpack.c.l.b16 %v259
    %v772 = vunpack.c.l.b16 %v260
    %v773 = vunpack.c.l.b16 %v261
    %v774 = vunpack.c.l.b16 %v262
    %v775 = vunpack.c.l.b16 %v263
    %v776 = vunpack.c.l.b16 %v264
    %v777 = vunpack.c.l.b16 %v265
    %v778 = vunpack.c.l.b16 %v266
    %v779 = vunpack.c.l.b16 %v267
    %v780 = vunpack.c.l.b16 %v268
    %v781 = vunpack.c.l.b16 %v269
    %v782 = vunpack.c.l.b16 %v270
    %v783 = vunpack.c.l.b16 %v271
    %v784 = vunpack.c.l.b16 %v272
    %v785 = vunpack.c.l.b16 %v273
    %v786 = vunpack.c.l.b16 %v274
    %v787 = vunpack.c.l.b16 %v275
    %v788 = vunpack.c.l.b16 %v276
    %v789 = vunpack.c.l.b16 %v277
    %v790 = vunpack.c.l.b16 %v278
    %v791 = vunpack.c.l.b16 %v279
    %v792 = vunpack.c.l.b16 %v280
    %v793 = vunpack.c.l.b16 %v281
    %v794 = vunpack.c.l.b16 %v282
    %v795 = vunpack.c.l.b16 %v283
    %v796 = vunpack.c.l.b16 %v284
    %v797 = vunpack.c.l.b16 %v285
    %v798 = vunpack.c.l.b16 %v286
    %v799 = vunpack.c.l.b16 %v287
    %v800 = vunpack.c.l.b16 %v288
    %v801 = vunpack.c.l.b16 %v289
    %v802 = vunpack.c.l.b16 %v290
    %v803 = vunpack.c.l.b16 %v291
    %v804 = vunpack.c.l.b16 %v292
    %v805 = vunpack.c.l.b16 %v293
    %v806 = vunpack.c.l.b16 %v294
    %v807 = vunpack.c.l.b16 %v295
    %v808 = vunpack.c.l.b16 %v296
    %v809 = vunpack.c.l.b16 %v297
    %v810 = vunpack.c.l.b16 %v298
    %v811 = vunpack.c.l.b16 %v299
    %v812 = vunpack.c.l.b16 %v300
    %v813 = vunpack.c.l.b16 %v301
    %v814 = vunpack.c.l.b16 %v302
    %v815 = vunpack.c.l.b16 %v303
    %v816 = vunpack.c.l.b16 %v304
    %v817 = vunpack.c.l.b16 %v305
    %v818 = vunpack.c.l.b16 %v306
    %v819 = vunpack.c.l.b16 %v307
    %v820 = vunpack.c.l.b16 %v308
    %v821 = vunpack.c.l.b16 %v309
    %v822 = vunpack.c.l.b16 %v310
    %v823 = vunpack.c.l.b16 %v311
    %v824 = vunpack.c.l.b16 %v312
    %v825 = vunpack.c.l.b16 %v313
    %v826 = vunpack.c.l.b16 %v314
    %v827 = vunpack.c.l.b16 %v315
    %v828 = vunpack.c.l.b16 %v316
    %v829 = vunpack.c.l.b16 %v317
    %v830 = vunpack.c.l.b16 %v318
    %v831 = vunpack.c.l.b16 %v319
    %v832 = vunpack.c.l.b16 %v320
    %v833 = vunpack.c.l.b16 %v321
    %v834 = vunpack.c.l.b16 %v322
    %v835 = vunpack.c.l.b16 %v323
    %v836 = vunpack.c.l.b16 %v324
    %v837 = vunpack.c.l.b16 %v325
    %v838 = vunpack.c.l.b16 %v326
    %v839 = vunpack.c.l.b16 %v327
    %v840 = vunpack.c.l.b16 %v328
    %v841 = vunpack.c.l.b16 %v329
    %v842 = vunpack.c.l.b16 %v330
    %v843 = vunpack.c.l.b16 %v331
    %v844 = vunpack.c.l.b16 %v332
    %v845 = vunpack.c.l.b16 %v333
    %v846 = vunpack.c.l.b16 %v334
    %v847 = vunpack.c.l.b16 %v335
    %v848 = vunpack.c.l.b16 %v336
    %v849 = vunpack.c.l.b16 %v337
    %v850 = vunpack.c.l.b16 %v338
    %v851 = vunpack.c.l.b16 %v339
    %v852 = vunpack.c.l.b16 %v340
    %v853 = vunpack.c.l.b16 %v341
    %v854 = vunpack.c.l.b16 %v342
    %v855 = vunpack.c.l.b16 %v343
    %v856 = vunpack.c.l.b16 %v344
    %v857 = vunpack.c.l.b16 %v345
    %v858 = vunpack.c.l.b16 %v346
    %v859 = vunpack.c.l.b16 %v347
    %v860 = vunpack.c.l.b16 %v348
    %v861 = vunpack.c.l.b16 %v349
    %v862 = vunpack.c.l.b16 %v350
    %v863 = vunpack.c.l.b16 %v351
    %v864 = vunpack.c.l.b16 %v352
    %v865 = vunpack.c.l.b16 %v353
    %v866 = vunpack.c.l.b16 %v354
    %v867 = vunpack.c.l.b16 %v355
    %v868 = vunpack.c.l.b16 %v356
    %v869 = vunpack.c.l.b16 %v357
    %v870 = vunpack.c.l.b16 %v358
    %v871 = vunpack.c.l.b16 %v359
    %v872 = vunpack.c.l.b16 %v360
    %v873 = vunpack.c.l.b16 %v361
    %v874 = vunpack.c.l.b16 %v362
    %v875 = vunpack.c.l.b16 %v363
    %v876 = vunpack.c.l.b16 %v364
    %v877 = vunpack.c.l.b16 %v365
    %v878 = vunpack.c.l.b16 %v366
    %v879 = vunpack.c.l.b16 %v367
    %v880 = vunpack.c.l.b16 %v368
    %v881 = vunpack.c.l.b16 %v369
    %v882 = vunpack.c.l.b16 %v370
    %v883 = vunpack.c.l.b16 %v371
    %v884 = vunpack.c.l.b16 %v372
    %v885 = vunpack.c.l.b16 %v373
    %v886 = vunpack.c.l.b16 %v374
    %v887 = vunpack.c.l.b16 %v375
    %v888 = vunpack.c.l.b16 %v376
    %v889 = vunpack.c.l.b16 %v377
    %v890 = vunpack.c.l.b16 %v378
    %v891 = vunpack.c.l.b16 %v379
    %v892 = vunpack.c.l.b16 %v380
    %v893 = vunpack.c.l.b16 %v381
    %v894 = vunpack.c.l.b16 %v382
    %v895 = vunpack.c.l.b16 %v383
    %v896 = vunpack.c.l.b16 %v384
    %v897 = vunpack.c.l.b16 %v385
    %v898 = vunpack.c.l.b16 %v386
    %v899 = vunpack.c.l.b16 %v387
    %v900 = vunpack.c.l.b16 %v388
    %v901 = vunpack.c.l.b16 %v389
    %v902 = vunpack.c.l.b16 %v390
    %v903 = vunpack.c.l.b16 %v391
    %v904 = vunpack.c.l.b16 %v392
    %v905 = vunpack.c.l.b16 %v393
    %v906 = vunpack.c.l.b16 %v394
    %v907 = vunpack.c.l.b16 %v395
    %v908 = vunpack.c.l.b16 %v396
    %v909 = vunpack.c.l.b16 %v397
    %v910 = vunpack.c.l.b16 %v398
    %v911 = vunpack.c.l.b16 %v399
    %v912 = vunpack.c.l.b16 %v400
    %v913 = vunpack.c.l.b16 %v401
    %v914 = vunpack.c.l.b16 %v402
    %v915 = vunpack.c.l.b16 %v403
    %v916 = vunpack.c.l.b16 %v404
    %v917 = vunpack.c.l.b16 %v405
    %v918 = vunpack.c.l.b16 %v406
    %v919 = vunpack.c.l.b16 %v407
    %v920 = vunpack.c.l.b16 %v408
    %v921 = vunpack.c.l.b16 %v409
    %v922 = vunpack.c.l.b16 %v410
    %v923 = vunpack.c.l.b16 %v411
    %v924 = vunpack.c.l.b16 %v412
    %v925 = vunpack.c.l.b16 %v413
    %v926 = vunpack.c.l.b16 %v414
    %v927 = vunpack.c.l.b16 %v415
    %v928 = vunpack.c.l.b16 %v416
    %v929 = vunpack.c.l.b16 %v417
    %v930 = vunpack.c.l.b16 %v418
    %v931 = vunpack.c.l.b16 %v419
    %v932 = vunpack.c.l.b16 %v420
    %v933 = vunpack.c.l.b16 %v421
    %v934 = vunpack.c.l.b16 %v422
    %v935 = vunpack.c.l.b16 %v423
    %v936 = vunpack.c.l.b16 %v424
    %v937 = vunpack.c.l.b16 %v425
    %v938 = vunpack.c.l.b16 %v426
    %v939 = vunpack.c.l.b16 %v427
    %v940 = vunpack.c.l.b16 %v428
    %v941 = vunpack.c.l.b16 %v429
    %v942 = vunpack.c.l.b16 %v430
    %v943 = vunpack.c.l.b16 %v431
    %v944 = vunpack.c.l.b16 %v432
    %v945 = vunpack.c.l.b16 %v433
    %v946 = vunpack.c.l.b16 %v434
    %v947 = vunpack.c.l.b16 %v435
    %v948 = vunpack.c.l.b16 %v436
    %v949 = vunpack.c.l.b16 %v437
    %v950 = vunpack.c.l.b16 %v438
    %v951 = vunpack.c.l.b16 %v439
    %v952 = vunpack.c.l.b16 %v440
    %v953 = vunpack.c.l.b16 %v441
    %v954 = vunpack.c.l.b16 %v442
    %v955 = vunpack.c.l.b16 %v443
    %v956 = vunpack.c.l.b16 %v444
    %v957 = vunpack.c.l.b16 %v445
    %v958 = vunpack.c.l.b16 %v446
    %v959 = vunpack.c.l.b16 %v447
    %v960 = vunpack.c.l.b16 %v448
    %v961 = vunpack.c.l.b16 %v449
    %v962 = vunpack.c.l.b16 %v450
    %v963 = vunpack.c.l.b16 %v451
    %v964 = vunpack.c.l.b16 %v452
    %v965 = vunpack.c.l.b16 %v453
    %v966 = vunpack.c.l.b16 %v454
    %v967 = vunpack.c.l.b16 %v455
    %v968 = vunpack.c.l.b16 %v456
    %v969 = vunpack.c.l.b16 %v457
    %v970 = vunpack.c.l.b16 %v458
    %v971 = vunpack.c.l.b16 %v459
    %v972 = vunpack.c.l.b16 %v460
    %v973 = vunpack.c.l.b16 %v461
    %v974 = vunpack.c.l.b16 %v462
    %v975 = vunpack.c.l.b16 %v463
    %v976 = vunpack.c.l.b16 %v464
    %v977 = vunpack.c.l.b16 %v465
    %v978 = vunpack.c.l.b16 %v466
    %v979 = vunpack.c.l.b16 %v467
    %v980 = vunpack.c.l.b16 %v468
    %v981 = vunpack.c.l.b16 %v469
    %v982 = vunpack.c.l.b16 %v470
    %v983 = vunpack.c.l.b16 %v471
    %v984 = vunpack.c.l.b16 %v472
    %v985 = vunpack.c.l.b16 %v473
    %v986 = vunpack.c.l.b16 %v474
    %v987 = vunpack.c.l.b16 %v475
    %v988 = vunpack.c.l.b16 %v476
    %v989 = vunpack.c.l.b16 %v477
    %v990 = vunpack.c.l.b16 %v478
    %v991 = vunpack.c.l.b16 %v479
    %v992 = vunpack.c.l.b16 %v480
    %v993 = vunpack.c.l.b16 %v481
    %v994 = vunpack.c.l.b16 %v482
    %v995 = vunpack.c.l.b16 %v483
    %v996 = vunpack.c.l.b16 %v484
    %v997 = vunpack.c.l.b16 %v485
    %v998 = vunpack.c.l.b16 %v486
    %v999 = vunpack.c.l.b16 %v487
    %v1000 = vunpack.c.l.b16 %v488
    %v1001 = vunpack.c.l.b16 %v489
    %v1002 = vunpack.c.l.b16 %v490
    %v1003 = vunpack.c.l.b16 %v491
    %v1004 = vunpack.c.l.b16 %v492
    %v1005 = vunpack.c.l.b16 %v493
    %v1006 = vunpack.c.l.b16 %v494
    %v1007 = vunpack.c.l.b16 %v495
    %v1008 = vunpack.c.l.b16 %v496
    %v1009 = vunpack.c.l.b16 %v497
    %v1010 = vunpack.c.l.b16 %v498
    %v1011 = vunpack.c.l.b16 %v499
    %v1012 = vunpack.c.l.b16 %v500
    %v1013 = vunpack.c.l.b16 %v501
    %v1014 = vunpack.c.l.b16 %v502
    %v1015 = vunpack.c.l.b16 %v503
    %v1016 = vunpack.c.l.b16 %v504
    %v1017 = vunpack.c.l.b16 %v505
    %v1018 = vpack.c.b16 %v763, %v762
    %v1019 = vpack.c.b16 %v765, %v764
    %v1020 = vpack.c.b16 %v767, %v766
    %v1021 = vpack.c.b16 %v769, %v768
    %v1022 = vpack.c.b16 %v771, %v770
    %v1023 = vpack.c.b16 %v773, %v772
    %v1024 = vpack.c.b16 %v775, %v774
    %v1025 = vpack.c.b16 %v777, %v776
    %v1026 = vpack.c.b16 %v779, %v778
    %v1027 = vpack.c.b16 %v781, %v780
    %v1028 = vpack.c.b16 %v783, %v782
    %v1029 = vpack.c.b16 %v785, %v784
    %v1030 = vpack.c.b16 %v787, %v786
    %v1031 = vpack.c.b16 %v789, %v788
    %v1032 = vpack.c.b16 %v791, %v790
    %v1033 = vpack.c.b16 %v793, %v792
    %v1034 = vpack.c.b16 %v795, %v794
    %v1035 = vpack.c.b16 %v797, %v796
    %v1036 = vpack.c.b16 %v799, %v798
    %v1037 = vpack.c.b16 %v801, %v800
    %v1038 = vpack.c.b16 %v803, %v802
    %v1039 = vpack.c.b16 %v805, %v804
    %v1040 = vpack.c.b16 %v807, %v806
    %v1041 = vpack.c.b16 %v809, %v808
    %v1042 = vpack.c.b16 %v811, %v810
    %v1043 = vpack.c.b16 %v813, %v812
    %v1044 = vpack.c.b16 %v815, %v814
    %v1045 = vpack.c.b16 %v817, %v816
    %v1046 = vpack.c.b16 %v819, %v818
    %v1047 = vpack.c.b16 %v821, %v820
    %v1048 = vpack.c.b16 %v823, %v822
    %v1049 = vpack.c.b16 %v825, %v824
    %v1050 = vpack.c.b16 %v827, %v826
    %v1051 = vpack.c.b16 %v829, %v828
    %v1052 = vpack.c.b16 %v831, %v830
    %v1053 = vpack.c.b16 %v833, %v832
    %v1054 = vpack.c.b16 %v835, %v834
    %v1055 = vpack.c.b16 %v837, %v836
    %v1056 = vpack.c.b16 %v839, %v838
    %v1057 = vpack.c.b16 %v841, %v840
    %v1058 = vpack.c.b16 %v843, %v842
    %v1059 = vpack.c.b16 %v845, %v844
    %v1060 = vpack.c.b16 %v847, %v846
    %v1061 = vpack.c.b16 %v849, %v848
    %v1062 = vpack.c.b16 %v851, %v850
    %v1063 = vpack.c.b16 %v853, %v852
    %v1064 = vpack.c.b16 %v855, %v854
    %v1065 = vpack.c.b16 %v857, %v856
    %v1066 = vpack.c.b16 %v859, %v858
    %v1067 = vpack.c.b16 %v861, %v860
    %v1068 = vpack.c.b16 %v863, %v862
    %v1069 = vpack.c.b16 %v865, %v864
    %v1070 = vpack.c.b16 %v867, %v866
    %v1071 = vpack.c.b16 %v869, %v868
    %v1072 = vpack.c.b16 %v871, %v870
    %v1073 = vpack.c.b16 %v873, %v872
    %v1074 = vpack.c.b16 %v875, %v874
    %v1075 = vpack.c.b16 %v877, %v876
    %v1076 = vpack.c.b16 %v879, %v878
    %v1077 = vpack.c.b16 %v881, %v880
    %v1078 = vpack.c.b16 %v883, %v882
    %v1079 = vpack.c.b16 %v885, %v884
    %v1080 = vpack.c.b16 %v887, %v886
    %v1081 = vpack.c.b16 %v889, %v888
    %v1082 = vpack.c.b16 %v891, %v890
    %v1083 = vpack.c.b16 %v893, %v892
    %v1084 = vpack.c.b16 %v895, %v894
    %v1085 = vpack.c.b16 %v897, %v896
    %v1086 = vpack.c.b16 %v899, %v898
    %v1087 = vpack.c.b16 %v901, %v900
    %v1088 = vpack.c.b16 %v903, %v902
    %v1089 = vpack.c.b16 %v905, %v904
    %v1090 = vpack.c.b16 %v907, %v906
    %v1091 = vpack.c.b16 %v909, %v908
    %v1092 = vpack.c.b16 %v911, %v910
    %v1093 = vpack.c.b16 %v913, %v912
    %v1094 = vpack.c.b16 %v915, %v914
    %v1095 = vpack.c.b16 %v917, %v916
    %v1096 = vpack.c.b16 %v919, %v918
    %v1097 = vpack.c.b16 %v921, %v920
    %v1098 = vpack.c.b16 %v923, %v922
    %v1099 = vpack.c.b16 %v925, %v924
    %v1100 = vpack.c.b16 %v927, %v926
    %v1101 = vpack.c.b16 %v929, %v928
    %v1102 = vpack.c.b16 %v931, %v930
    %v1103 = vpack.c.b16 %v933, %v932
    %v1104 = vpack.c.b16 %v935, %v934
    %v1105 = vpack.c.b16 %v937, %v936
    %v1106 = vpack.c.b16 %v939, %v938
    %v1107 = vpack.c.b16 %v941, %v940
    %v1108 = vpack.c.b16 %v943, %v942
    %v1109 = vpack.c.b16 %v945, %v944
    %v1110 = vpack.c.b16 %v947, %v946
    %v1111 = vpack.c.b16 %v949, %v948
    %v1112 = vpack.c.b16 %v951, %v950
    %v1113 = vpack.c.b16 %v953, %v952
    %v1114 = vpack.c.b16 %v955, %v954
    %v1115 = vpack.c.b16 %v957, %v956
    %v1116 = vpack.c.b16 %v959, %v958
    %v1117 = vpack.c.b16 %v961, %v960
    %v1118 = vpack.c.b16 %v963, %v962
    %v1119 = vpack.c.b16 %v965, %v964
    %v1120 = vpack.c.b16 %v967, %v966
    %v1121 = vpack.c.b16 %v969, %v968
    %v1122 = vpack.c.b16 %v971, %v970
    %v1123 = vpack.c.b16 %v973, %v972
    %v1124 = vpack.c.b16 %v975, %v974
    %v1125 = vpack.c.b16 %v977, %v976
    %v1126 = vpack.c.b16 %v979, %v978
    %v1127 = vpack.c.b16 %v981, %v980
    %v1128 = vpack.c.b16 %v983, %v982
    %v1129 = vpack.c.b16 %v985, %v984
    %v1130 = vpack.c.b16 %v987, %v986
    %v1131 = vpack.c.b16 %v989, %v988
    %v1132 = vpack.c.b16 %v991, %v990
    %v1133 = vpack.c.b16 %v993, %v992
    %v1134 = vpack.c.b16 %v995, %v994
    %v1135 = vpack.c.b16 %v997, %v996
    %v1136 = vpack.c.b16 %v999, %v998
    %v1137 = vpack.c.b16 %v1001, %v1000
    %v1138 = vpack.c.b16 %v1003, %v1002
    %v1139 = vpack.c.b16 %v1005, %v1004
    %v1140 = vpack.c.b16 %v1007, %v1006
    %v1141 = vpack.c.b16 %v1009, %v1008
    %v1142 = vpack.c.b16 %v1011, %v1010
    %v1143 = vpack.c.b16 %v1013, %v1012
    %v1144 = vpack.c.b16 %v1015, %v1014
    %v1145 = vpack.c.b16 %v1017, %v1016
    %1274 = vmatpush.bf16.msra.mxu0 %v1025
    %1275 = vmatpush.bf16.msra.mxu0 %v1024
    %1276 = vmatpush.bf16.msra.mxu0 %v1023
    %1277 = vmatpush.bf16.msra.mxu0 %v1022
    %1278 = vmatpush.bf16.msra.mxu0 %v1021
    %1279 = vmatpush.bf16.msra.mxu0 %v1020
    %1280 = vmatpush.bf16.msra.mxu0 %v1019
    %1281 = vmatpush.bf16.msra.mxu0 %v1018
    %1282 = vmatmul.bf16.gmra.mxu0 %v234
    %v1283 = vpop.f32.mrf.mxu0
    %v1284 = vadd.f32 0.0, %v1283
    %v1285 = vpop.f32.mrf.mxu0
    %1286 = vdwg.mxu0
    %1287 = vmatpush.bf16.msra.mxu0 %v1033
    %1288 = vmatpush.bf16.msra.mxu0 %v1032
    %1289 = vmatpush.bf16.msra.mxu0 %v1031
    %1290 = vmatpush.bf16.msra.mxu0 %v1030
    %1291 = vmatpush.bf16.msra.mxu0 %v1029
    %1292 = vmatpush.bf16.msra.mxu0 %v1028
    %1293 = vmatpush.bf16.msra.mxu0 %v1027
    %1294 = vmatpush.bf16.msra.mxu0 %v1026
    %1295 = vmatmul.bf16.gmra.mxu0 %v235
    %v1296 = vpop.f32.mrf.mxu0
    %v1297 = vadd.f32 %v1284, %v1296
    %v1298 = vpop.f32.mrf.mxu0
    %1299 = vdwg.mxu0
    %1300 = vmatpush.bf16.msra.mxu0 %v1041
    %1301 = vmatpush.bf16.msra.mxu0 %v1040
    %1302 = vmatpush.bf16.msra.mxu0 %v1039
    %1303 = vmatpush.bf16.msra.mxu0 %v1038
    %1304 = vmatpush.bf16.msra.mxu0 %v1037
    %1305 = vmatpush.bf16.msra.mxu0 %v1036
    %1306 = vmatpush.bf16.msra.mxu0 %v1035
    %1307 = vmatpush.bf16.msra.mxu0 %v1034
    %1308 = vmatmul.bf16.gmra.mxu0 %v236
    %v1309 = vpop.f32.mrf.mxu0
    %v1310 = vadd.f32 %v1297, %v1309
    %v1311 = vpop.f32.mrf.mxu0
    %1312 = vdwg.mxu0
    %1313 = vmatpush.bf16.msra.mxu0 %v1049
    %1314 = vmatpush.bf16.msra.mxu0 %v1048
    %1315 = vmatpush.bf16.msra.mxu0 %v1047
    %1316 = vmatpush.bf16.msra.mxu0 %v1046
    %1317 = vmatpush.bf16.msra.mxu0 %v1045
    %1318 = vmatpush.bf16.msra.mxu0 %v1044
    %1319 = vmatpush.bf16.msra.mxu0 %v1043
    %1320 = vmatpush.bf16.msra.mxu0 %v1042
    %1321 = vmatmul.bf16.gmra.mxu0 %v237
    %v1322 = vpop.f32.mrf.mxu0
    %v1323 = vadd.f32 %v1310, %v1322
    %v1324 = vpop.f32.mrf.mxu0
    %1325 = vdwg.mxu0
    %1326 = vmatpush.bf16.msra.mxu0 %v1057
    %1327 = vmatpush.bf16.msra.mxu0 %v1056
    %1328 = vmatpush.bf16.msra.mxu0 %v1055
    %1329 = vmatpush.bf16.msra.mxu0 %v1054
    %1330 = vmatpush.bf16.msra.mxu0 %v1053
    %1331 = vmatpush.bf16.msra.mxu0 %v1052
    %1332 = vmatpush.bf16.msra.mxu0 %v1051
    %1333 = vmatpush.bf16.msra.mxu0 %v1050
    %1334 = vmatmul.bf16.gmra.mxu0 %v238
    %v1335 = vpop.f32.mrf.mxu0
    %v1336 = vadd.f32 %v1323, %v1335
    %v1337 = vpop.f32.mrf.mxu0
    %1338 = vdwg.mxu0
    %1339 = vmatpush.bf16.msra.mxu0 %v1065
    %1340 = vmatpush.bf16.msra.mxu0 %v1064
    %1341 = vmatpush.bf16.msra.mxu0 %v1063
    %1342 = vmatpush.bf16.msra.mxu0 %v1062
    %1343 = vmatpush.bf16.msra.mxu0 %v1061
    %1344 = vmatpush.bf16.msra.mxu0 %v1060
    %1345 = vmatpush.bf16.msra.mxu0 %v1059
    %1346 = vmatpush.bf16.msra.mxu0 %v1058
    %1347 = vmatmul.bf16.gmra.mxu0 %v239
    %v1348 = vpop.f32.mrf.mxu0
    %v1349 = vadd.f32 %v1336, %v1348
    %v1350 = vpop.f32.mrf.mxu0
    %1351 = vdwg.mxu0
    %1352 = vmatpush.bf16.msra.mxu0 %v1073
    %1353 = vmatpush.bf16.msra.mxu0 %v1072
    %1354 = vmatpush.bf16.msra.mxu0 %v1071
    %1355 = vmatpush.bf16.msra.mxu0 %v1070
    %1356 = vmatpush.bf16.msra.mxu0 %v1069
    %1357 = vmatpush.bf16.msra.mxu0 %v1068
    %1358 = vmatpush.bf16.msra.mxu0 %v1067
    %1359 = vmatpush.bf16.msra.mxu0 %v1066
    %1360 = vmatmul.bf16.gmra.mxu0 %v240
    %v1361 = vpop.f32.mrf.mxu0
    %v1362 = vadd.f32 %v1349, %v1361
    %v1363 = vpop.f32.mrf.mxu0
    %1364 = vdwg.mxu0
    %1365 = vmatpush.bf16.msra.mxu0 %v1081
    %1366 = vmatpush.bf16.msra.mxu0 %v1080
    %1367 = vmatpush.bf16.msra.mxu0 %v1079
    %1368 = vmatpush.bf16.msra.mxu0 %v1078
    %1369 = vmatpush.bf16.msra.mxu0 %v1077
    %1370 = vmatpush.bf16.msra.mxu0 %v1076
    %1371 = vmatpush.bf16.msra.mxu0 %v1075
    %1372 = vmatpush.bf16.msra.mxu0 %v1074
    %1373 = vmatmul.bf16.gmra.mxu0 %v241
    %v1374 = vpop.f32.mrf.mxu0
    %v1375 = vadd.f32 %v1362, %v1374
    %v1376 = vpop.f32.mrf.mxu0
    %1377 = vdwg.mxu0
    %1378 = vmatpush.bf16.msra.mxu0 %v1089
    %1379 = vmatpush.bf16.msra.mxu0 %v1088
    %1380 = vmatpush.bf16.msra.mxu0 %v1087
    %1381 = vmatpush.bf16.msra.mxu0 %v1086
    %1382 = vmatpush.bf16.msra.mxu0 %v1085
    %1383 = vmatpush.bf16.msra.mxu0 %v1084
    %1384 = vmatpush.bf16.msra.mxu0 %v1083
    %1385 = vmatpush.bf16.msra.mxu0 %v1082
    %1386 = vmatmul.bf16.gmra.mxu0 %v242
    %v1387 = vpop.f32.mrf.mxu0
    %v1388 = vadd.f32 %v1375, %v1387
    %v1389 = vpop.f32.mrf.mxu0
    %1390 = vdwg.mxu0
    %1391 = vmatpush.bf16.msra.mxu0 %v1097
    %1392 = vmatpush.bf16.msra.mxu0 %v1096
    %1393 = vmatpush.bf16.msra.mxu0 %v1095
    %1394 = vmatpush.bf16.msra.mxu0 %v1094
    %1395 = vmatpush.bf16.msra.mxu0 %v1093
    %1396 = vmatpush.bf16.msra.mxu0 %v1092
    %1397 = vmatpush.bf16.msra.mxu0 %v1091
    %1398 = vmatpush.bf16.msra.mxu0 %v1090
    %1399 = vmatmul.bf16.gmra.mxu0 %v243
    %v1400 = vpop.f32.mrf.mxu0
    %v1401 = vadd.f32 %v1388, %v1400
    %v1402 = vpop.f32.mrf.mxu0
    %1403 = vdwg.mxu0
    %1404 = vmatpush.bf16.msra.mxu0 %v1105
    %1405 = vmatpush.bf16.msra.mxu0 %v1104
    %1406 = vmatpush.bf16.msra.mxu0 %v1103
    %1407 = vmatpush.bf16.msra.mxu0 %v1102
    %1408 = vmatpush.bf16.msra.mxu0 %v1101
    %1409 = vmatpush.bf16.msra.mxu0 %v1100
    %1410 = vmatpush.bf16.msra.mxu0 %v1099
    %1411 = vmatpush.bf16.msra.mxu0 %v1098
    %1412 = vmatmul.bf16.gmra.mxu0 %v244
    %v1413 = vpop.f32.mrf.mxu0
    %v1414 = vadd.f32 %v1401, %v1413
    %v1415 = vpop.f32.mrf.mxu0
    %1416 = vdwg.mxu0
    %1417 = vmatpush.bf16.msra.mxu0 %v1113
    %1418 = vmatpush.bf16.msra.mxu0 %v1112
    %1419 = vmatpush.bf16.msra.mxu0 %v1111
    %1420 = vmatpush.bf16.msra.mxu0 %v1110
    %1421 = vmatpush.bf16.msra.mxu0 %v1109
    %1422 = vmatpush.bf16.msra.mxu0 %v1108
    %1423 = vmatpush.bf16.msra.mxu0 %v1107
    %1424 = vmatpush.bf16.msra.mxu0 %v1106
    %1425 = vmatmul.bf16.gmra.mxu0 %v245
    %v1426 = vpop.f32.mrf.mxu0
    %v1427 = vadd.f32 %v1414, %v1426
    %v1428 = vpop.f32.mrf.mxu0
    %1429 = vdwg.mxu0
    %1430 = vmatpush.bf16.msra.mxu0 %v1121
    %1431 = vmatpush.bf16.msra.mxu0 %v1120
    %1432 = vmatpush.bf16.msra.mxu0 %v1119
    %1433 = vmatpush.bf16.msra.mxu0 %v1118
    %1434 = vmatpush.bf16.msra.mxu0 %v1117
    %1435 = vmatpush.bf16.msra.mxu0 %v1116
    %1436 = vmatpush.bf16.msra.mxu0 %v1115
    %1437 = vmatpush.bf16.msra.mxu0 %v1114
    %1438 = vmatmul.bf16.gmra.mxu0 %v246
    %v1439 = vpop.f32.mrf.mxu0
    %v1440 = vadd.f32 %v1427, %v1439
    %v1441 = vpop.f32.mrf.mxu0
    %1442 = vdwg.mxu0
    %1443 = vmatpush.bf16.msra.mxu0 %v1129
    %1444 = vmatpush.bf16.msra.mxu0 %v1128
    %1445 = vmatpush.bf16.msra.mxu0 %v1127
    %1446 = vmatpush.bf16.msra.mxu0 %v1126
    %1447 = vmatpush.bf16.msra.mxu0 %v1125
    %1448 = vmatpush.bf16.msra.mxu0 %v1124
    %1449 = vmatpush.bf16.msra.mxu0 %v1123
    %1450 = vmatpush.bf16.msra.mxu0 %v1122
    %1451 = vmatmul.bf16.gmra.mxu0 %v247
    %v1452 = vpop.f32.mrf.mxu0
    %v1453 = vadd.f32 %v1440, %v1452
    %v1454 = vpop.f32.mrf.mxu0
    %1455 = vdwg.mxu0
    %1456 = vmatpush.bf16.msra.mxu0 %v1137
    %1457 = vmatpush.bf16.msra.mxu0 %v1136
    %1458 = vmatpush.bf16.msra.mxu0 %v1135
    %1459 = vmatpush.bf16.msra.mxu0 %v1134
    %1460 = vmatpush.bf16.msra.mxu0 %v1133
    %1461 = vmatpush.bf16.msra.mxu0 %v1132
    %1462 = vmatpush.bf16.msra.mxu0 %v1131
    %1463 = vmatpush.bf16.msra.mxu0 %v1130
    %1464 = vmatmul.bf16.gmra.mxu0 %v248
    %v1465 = vpop.f32.mrf.mxu0
    %v1466 = vadd.f32 %v1453, %v1465
    %v1467 = vpop.f32.mrf.mxu0
    %1468 = vdwg.mxu0
    %1469 = vmatpush.bf16.msra.mxu0 %v1145
    %1470 = vmatpush.bf16.msra.mxu0 %v1144
    %1471 = vmatpush.bf16.msra.mxu0 %v1143
    %1472 = vmatpush.bf16.msra.mxu0 %v1142
    %1473 = vmatpush.bf16.msra.mxu0 %v1141
    %1474 = vmatpush.bf16.msra.mxu0 %v1140
    %1475 = vmatpush.bf16.msra.mxu0 %v1139
    %1476 = vmatpush.bf16.msra.mxu0 %v1138
    %1477 = vmatmul.bf16.gmra.mxu0 %v249
    %v1478 = vpop.f32.mrf.mxu0
    %v1479 = vadd.f32 %v1466, %v1478
    %v1480 = vpop.f32.mrf.mxu0
    %1481 = vdwg.mxu0
    %v1482 = vpack.c.bf16 %v1479, %v1479
    %v1483 = vld [vmem:[%s3] sm:$0xff]
    %v1484 = vld [vmem:[%s3 + $0x8] sm:$0xff]
    %v1485 = vld [vmem:[%s3 + $0x10] sm:$0xff]
    %v1486 = vld [vmem:[%s3 + $0x18] sm:$0xff]
    %v1487 = vld [vmem:[%s3 + $0x20] sm:$0xff]
    %v1488 = vld [vmem:[%s3 + $0x28] sm:$0xff]
    %v1489 = vld [vmem:[%s3 + $0x30] sm:$0xff]
    %v1490 = vld [vmem:[%s3 + $0x38] sm:$0xff]
    %v1491 = vld [vmem:[%s3 + $0x40] sm:$0xff]
    %v1492 = vld [vmem:[%s3 + $0x48] sm:$0xff]
    %v1493 = vld [vmem:[%s3 + $0x50] sm:$0xff]
    %v1494 = vld [vmem:[%s3 + $0x58] sm:$0xff]
    %v1495 = vld [vmem:[%s3 + $0x60] sm:$0xff]
    %v1496 = vld [vmem:[%s3 + $0x68] sm:$0xff]
    %v1497 = vld [vmem:[%s3 + $0x70] sm:$0xff]
    %v1498 = vld [vmem:[%s3 + $0x78] sm:$0xff]
    %v1499 = vld [vmem:[%s3 + $0x80] sm:$0xff]
    %v1500 = vld [vmem:[%s3 + $0x88] sm:$0xff]
    %v1501 = vld [vmem:[%s3 + $0x90] sm:$0xff]
    %v1502 = vld [vmem:[%s3 + $0x98] sm:$0xff]
    %v1503 = vld [vmem:[%s3 + $0xa0] sm:$0xff]
    %v1504 = vld [vmem:[%s3 + $0xa8] sm:$0xff]
    %v1505 = vld [vmem:[%s3 + $0xb0] sm:$0xff]
    %v1506 = vld [vmem:[%s3 + $0xb8] sm:$0xff]
    %v1507 = vld [vmem:[%s3 + $0xc0] sm:$0xff]
    %v1508 = vld [vmem:[%s3 + $0xc8] sm:$0xff]
    %v1509 = vld [vmem:[%s3 + $0xd0] sm:$0xff]
    %v1510 = vld [vmem:[%s3 + $0xd8] sm:$0xff]
    %v1511 = vld [vmem:[%s3 + $0xe0] sm:$0xff]
    %v1512 = vld [vmem:[%s3 + $0xe8] sm:$0xff]
    %v1513 = vld [vmem:[%s3 + $0xf0] sm:$0xff]
    %v1514 = vld [vmem:[%s3 + $0xf8] sm:$0xff]
    %v1515 = vld [vmem:[%s3 + $0x100] sm:$0xff]
    %v1516 = vld [vmem:[%s3 + $0x108] sm:$0xff]
    %v1517 = vld [vmem:[%s3 + $0x110] sm:$0xff]
    %v1518 = vld [vmem:[%s3 + $0x118] sm:$0xff]
    %v1519 = vld [vmem:[%s3 + $0x120] sm:$0xff]
    %v1520 = vld [vmem:[%s3 + $0x128] sm:$0xff]
    %v1521 = vld [vmem:[%s3 + $0x130] sm:$0xff]
    %v1522 = vld [vmem:[%s3 + $0x138] sm:$0xff]
    %v1523 = vld [vmem:[%s3 + $0x140] sm:$0xff]
    %v1524 = vld [vmem:[%s3 + $0x148] sm:$0xff]
    %v1525 = vld [vmem:[%s3 + $0x150] sm:$0xff]
    %v1526 = vld [vmem:[%s3 + $0x158] sm:$0xff]
    %v1527 = vld [vmem:[%s3 + $0x160] sm:$0xff]
    %v1528 = vld [vmem:[%s3 + $0x168] sm:$0xff]
    %v1529 = vld [vmem:[%s3 + $0x170] sm:$0xff]
    %v1530 = vld [vmem:[%s3 + $0x178] sm:$0xff]
    %v1531 = vld [vmem:[%s3 + $0x180] sm:$0xff]
    %v1532 = vld [vmem:[%s3 + $0x188] sm:$0xff]
    %v1533 = vld [vmem:[%s3 + $0x190] sm:$0xff]
    %v1534 = vld [vmem:[%s3 + $0x198] sm:$0xff]
    %v1535 = vld [vmem:[%s3 + $0x1a0] sm:$0xff]
    %v1536 = vld [vmem:[%s3 + $0x1a8] sm:$0xff]
    %v1537 = vld [vmem:[%s3 + $0x1b0] sm:$0xff]
    %v1538 = vld [vmem:[%s3 + $0x1b8] sm:$0xff]
    %v1539 = vld [vmem:[%s3 + $0x1c0] sm:$0xff]
    %v1540 = vld [vmem:[%s3 + $0x1c8] sm:$0xff]
    %v1541 = vld [vmem:[%s3 + $0x1d0] sm:$0xff]
    %v1542 = vld [vmem:[%s3 + $0x1d8] sm:$0xff]
    %v1543 = vld [vmem:[%s3 + $0x1e0] sm:$0xff]
    %v1544 = vld [vmem:[%s3 + $0x1e8] sm:$0xff]
    %v1545 = vld [vmem:[%s3 + $0x1f0] sm:$0xff]
    %v1546 = vld [vmem:[%s3 + $0x1f8] sm:$0xff]
    %v1547 = vld [vmem:[%s3 + $0x200] sm:$0xff]
    %v1548 = vld [vmem:[%s3 + $0x208] sm:$0xff]
    %v1549 = vld [vmem:[%s3 + $0x210] sm:$0xff]
    %v1550 = vld [vmem:[%s3 + $0x218] sm:$0xff]
    %v1551 = vld [vmem:[%s3 + $0x220] sm:$0xff]
    %v1552 = vld [vmem:[%s3 + $0x228] sm:$0xff]
    %v1553 = vld [vmem:[%s3 + $0x230] sm:$0xff]
    %v1554 = vld [vmem:[%s3 + $0x238] sm:$0xff]
    %v1555 = vld [vmem:[%s3 + $0x240] sm:$0xff]
    %v1556 = vld [vmem:[%s3 + $0x248] sm:$0xff]
    %v1557 = vld [vmem:[%s3 + $0x250] sm:$0xff]
    %v1558 = vld [vmem:[%s3 + $0x258] sm:$0xff]
    %v1559 = vld [vmem:[%s3 + $0x260] sm:$0xff]
    %v1560 = vld [vmem:[%s3 + $0x268] sm:$0xff]
    %v1561 = vld [vmem:[%s3 + $0x270] sm:$0xff]
    %v1562 = vld [vmem:[%s3 + $0x278] sm:$0xff]
    %v1563 = vld [vmem:[%s3 + $0x280] sm:$0xff]
    %v1564 = vld [vmem:[%s3 + $0x288] sm:$0xff]
    %v1565 = vld [vmem:[%s3 + $0x290] sm:$0xff]
    %v1566 = vld [vmem:[%s3 + $0x298] sm:$0xff]
    %v1567 = vld [vmem:[%s3 + $0x2a0] sm:$0xff]
    %v1568 = vld [vmem:[%s3 + $0x2a8] sm:$0xff]
    %v1569 = vld [vmem:[%s3 + $0x2b0] sm:$0xff]
    %v1570 = vld [vmem:[%s3 + $0x2b8] sm:$0xff]
    %v1571 = vld [vmem:[%s3 + $0x2c0] sm:$0xff]
    %v1572 = vld [vmem:[%s3 + $0x2c8] sm:$0xff]
    %v1573 = vld [vmem:[%s3 + $0x2d0] sm:$0xff]
    %v1574 = vld [vmem:[%s3 + $0x2d8] sm:$0xff]
    %v1575 = vld [vmem:[%s3 + $0x2e0] sm:$0xff]
    %v1576 = vld [vmem:[%s3 + $0x2e8] sm:$0xff]
    %v1577 = vld [vmem:[%s3 + $0x2f0] sm:$0xff]
    %v1578 = vld [vmem:[%s3 + $0x2f8] sm:$0xff]
    %v1579 = vld [vmem:[%s3 + $0x300] sm:$0xff]
    %v1580 = vld [vmem:[%s3 + $0x308] sm:$0xff]
    %v1581 = vld [vmem:[%s3 + $0x310] sm:$0xff]
    %v1582 = vld [vmem:[%s3 + $0x318] sm:$0xff]
    %v1583 = vld [vmem:[%s3 + $0x320] sm:$0xff]
    %v1584 = vld [vmem:[%s3 + $0x328] sm:$0xff]
    %v1585 = vld [vmem:[%s3 + $0x330] sm:$0xff]
    %v1586 = vld [vmem:[%s3 + $0x338] sm:$0xff]
    %v1587 = vld [vmem:[%s3 + $0x340] sm:$0xff]
    %v1588 = vld [vmem:[%s3 + $0x348] sm:$0xff]
    %v1589 = vld [vmem:[%s3 + $0x350] sm:$0xff]
    %v1590 = vld [vmem:[%s3 + $0x358] sm:$0xff]
    %v1591 = vld [vmem:[%s3 + $0x360] sm:$0xff]
    %v1592 = vld [vmem:[%s3 + $0x368] sm:$0xff]
    %v1593 = vld [vmem:[%s3 + $0x370] sm:$0xff]
    %v1594 = vld [vmem:[%s3 + $0x378] sm:$0xff]
    %v1595 = vld [vmem:[%s3 + $0x380] sm:$0xff]
    %v1596 = vld [vmem:[%s3 + $0x388] sm:$0xff]
    %v1597 = vld [vmem:[%s3 + $0x390] sm:$0xff]
    %v1598 = vld [vmem:[%s3 + $0x398] sm:$0xff]
    %v1599 = vld [vmem:[%s3 + $0x3a0] sm:$0xff]
    %v1600 = vld [vmem:[%s3 + $0x3a8] sm:$0xff]
    %v1601 = vld [vmem:[%s3 + $0x3b0] sm:$0xff]
    %v1602 = vld [vmem:[%s3 + $0x3b8] sm:$0xff]
    %v1603 = vld [vmem:[%s3 + $0x3c0] sm:$0xff]
    %v1604 = vld [vmem:[%s3 + $0x3c8] sm:$0xff]
    %v1605 = vld [vmem:[%s3 + $0x3d0] sm:$0xff]
    %v1606 = vld [vmem:[%s3 + $0x3d8] sm:$0xff]
    %v1607 = vld [vmem:[%s3 + $0x3e0] sm:$0xff]
    %v1608 = vld [vmem:[%s3 + $0x3e8] sm:$0xff]
    %v1609 = vld [vmem:[%s3 + $0x3f0] sm:$0xff]
    %v1610 = vld [vmem:[%s3 + $0x3f8] sm:$0xff]
    %v1739 = vunpack.c.l.b16 %v1483
    %v1740 = vunpack.c.h.b16 %v1483
    %v1741 = vunpack.c.l.b16 %v1484
    %v1742 = vunpack.c.h.b16 %v1484
    %v1743 = vunpack.c.l.b16 %v1485
    %v1744 = vunpack.c.h.b16 %v1485
    %v1745 = vunpack.c.l.b16 %v1486
    %v1746 = vunpack.c.h.b16 %v1486
    %v1747 = vunpack.c.l.b16 %v1487
    %v1748 = vunpack.c.h.b16 %v1487
    %v1749 = vunpack.c.l.b16 %v1488
    %v1750 = vunpack.c.h.b16 %v1488
    %v1751 = vunpack.c.l.b16 %v1489
    %v1752 = vunpack.c.h.b16 %v1489
    %v1753 = vunpack.c.l.b16 %v1490
    %v1754 = vunpack.c.h.b16 %v1490
    %v1755 = vunpack.c.l.b16 %v1491
    %v1756 = vunpack.c.h.b16 %v1491
    %v1757 = vunpack.c.l.b16 %v1492
    %v1758 = vunpack.c.h.b16 %v1492
    %v1759 = vunpack.c.l.b16 %v1493
    %v1760 = vunpack.c.h.b16 %v1493
    %v1761 = vunpack.c.l.b16 %v1494
    %v1762 = vunpack.c.h.b16 %v1494
    %v1763 = vunpack.c.l.b16 %v1495
    %v1764 = vunpack.c.h.b16 %v1495
    %v1765 = vunpack.c.l.b16 %v1496
    %v1766 = vunpack.c.h.b16 %v1496
    %v1767 = vunpack.c.l.b16 %v1497
    %v1768 = vunpack.c.h.b16 %v1497
    %v1769 = vunpack.c.l.b16 %v1498
    %v1770 = vunpack.c.h.b16 %v1498
    %v1771 = vunpack.c.l.b16 %v1499
    %v1772 = vunpack.c.h.b16 %v1499
    %v1773 = vunpack.c.l.b16 %v1500
    %v1774 = vunpack.c.h.b16 %v1500
    %v1775 = vunpack.c.l.b16 %v1501
    %v1776 = vunpack.c.h.b16 %v1501
    %v1777 = vunpack.c.l.b16 %v1502
    %v1778 = vunpack.c.h.b16 %v1502
    %v1779 = vunpack.c.l.b16 %v1503
    %v1780 = vunpack.c.h.b16 %v1503
    %v1781 = vunpack.c.l.b16 %v1504
    %v1782 = vunpack.c.h.b16 %v1504
    %v1783 = vunpack.c.l.b16 %v1505
    %v1784 = vunpack.c.h.b16 %v1505
    %v1785 = vunpack.c.l.b16 %v1506
    %v1786 = vunpack.c.h.b16 %v1506
    %v1787 = vunpack.c.l.b16 %v1507
    %v1788 = vunpack.c.h.b16 %v1507
    %v1789 = vunpack.c.l.b16 %v1508
    %v1790 = vunpack.c.h.b16 %v1508
    %v1791 = vunpack.c.l.b16 %v1509
    %v1792 = vunpack.c.h.b16 %v1509
    %v1793 = vunpack.c.l.b16 %v1510
    %v1794 = vunpack.c.h.b16 %v1510
    %v1795 = vunpack.c.l.b16 %v1511
    %v1796 = vunpack.c.h.b16 %v1511
    %v1797 = vunpack.c.l.b16 %v1512
    %v1798 = vunpack.c.h.b16 %v1512
    %v1799 = vunpack.c.l.b16 %v1513
    %v1800 = vunpack.c.h.b16 %v1513
    %v1801 = vunpack.c.l.b16 %v1514
    %v1802 = vunpack.c.h.b16 %v1514
    %v1803 = vunpack.c.l.b16 %v1515
    %v1804 = vunpack.c.h.b16 %v1515
    %v1805 = vunpack.c.l.b16 %v1516
    %v1806 = vunpack.c.h.b16 %v1516
    %v1807 = vunpack.c.l.b16 %v1517
    %v1808 = vunpack.c.h.b16 %v1517
    %v1809 = vunpack.c.l.b16 %v1518
    %v1810 = vunpack.c.h.b16 %v1518
    %v1811 = vunpack.c.l.b16 %v1519
    %v1812 = vunpack.c.h.b16 %v1519
    %v1813 = vunpack.c.l.b16 %v1520
    %v1814 = vunpack.c.h.b16 %v1520
    %v1815 = vunpack.c.l.b16 %v1521
    %v1816 = vunpack.c.h.b16 %v1521
    %v1817 = vunpack.c.l.b16 %v1522
    %v1818 = vunpack.c.h.b16 %v1522
    %v1819 = vunpack.c.l.b16 %v1523
    %v1820 = vunpack.c.h.b16 %v1523
    %v1821 = vunpack.c.l.b16 %v1524
    %v1822 = vunpack.c.h.b16 %v1524
    %v1823 = vunpack.c.l.b16 %v1525
    %v1824 = vunpack.c.h.b16 %v1525
    %v1825 = vunpack.c.l.b16 %v1526
    %v1826 = vunpack.c.h.b16 %v1526
    %v1827 = vunpack.c.l.b16 %v1527
    %v1828 = vunpack.c.h.b16 %v1527
    %v1829 = vunpack.c.l.b16 %v1528
    %v1830 = vunpack.c.h.b16 %v1528
    %v1831 = vunpack.c.l.b16 %v1529
    %v1832 = vunpack.c.h.b16 %v1529
    %v1833 = vunpack.c.l.b16 %v1530
    %v1834 = vunpack.c.h.b16 %v1530
    %v1835 = vunpack.c.l.b16 %v1531
    %v1836 = vunpack.c.h.b16 %v1531
    %v1837 = vunpack.c.l.b16 %v1532
    %v1838 = vunpack.c.h.b16 %v1532
    %v1839 = vunpack.c.l.b16 %v1533
    %v1840 = vunpack.c.h.b16 %v1533
    %v1841 = vunpack.c.l.b16 %v1534
    %v1842 = vunpack.c.h.b16 %v1534
    %v1843 = vunpack.c.l.b16 %v1535
    %v1844 = vunpack.c.h.b16 %v1535
    %v1845 = vunpack.c.l.b16 %v1536
    %v1846 = vunpack.c.h.b16 %v1536
    %v1847 = vunpack.c.l.b16 %v1537
    %v1848 = vunpack.c.h.b16 %v1537
    %v1849 = vunpack.c.l.b16 %v1538
    %v1850 = vunpack.c.h.b16 %v1538
    %v1851 = vunpack.c.l.b16 %v1539
    %v1852 = vunpack.c.h.b16 %v1539
    %v1853 = vunpack.c.l.b16 %v1540
    %v1854 = vunpack.c.h.b16 %v1540
    %v1855 = vunpack.c.l.b16 %v1541
    %v1856 = vunpack.c.h.b16 %v1541
    %v1857 = vunpack.c.l.b16 %v1542
    %v1858 = vunpack.c.h.b16 %v1542
    %v1859 = vunpack.c.l.b16 %v1543
    %v1860 = vunpack.c.h.b16 %v1543
    %v1861 = vunpack.c.l.b16 %v1544
    %v1862 = vunpack.c.h.b16 %v1544
    %v1863 = vunpack.c.l.b16 %v1545
    %v1864 = vunpack.c.h.b16 %v1545
    %v1865 = vunpack.c.l.b16 %v1546
    %v1866 = vunpack.c.h.b16 %v1546
    %v1867 = vunpack.c.l.b16 %v1547
    %v1868 = vunpack.c.h.b16 %v1547
    %v1869 = vunpack.c.l.b16 %v1548
    %v1870 = vunpack.c.h.b16 %v1548
    %v1871 = vunpack.c.l.b16 %v1549
    %v1872 = vunpack.c.h.b16 %v1549
    %v1873 = vunpack.c.l.b16 %v1550
    %v1874 = vunpack.c.h.b16 %v1550
    %v1875 = vunpack.c.l.b16 %v1551
    %v1876 = vunpack.c.h.b16 %v1551
    %v1877 = vunpack.c.l.b16 %v1552
    %v1878 = vunpack.c.h.b16 %v1552
    %v1879 = vunpack.c.l.b16 %v1553
    %v1880 = vunpack.c.h.b16 %v1553
    %v1881 = vunpack.c.l.b16 %v1554
    %v1882 = vunpack.c.h.b16 %v1554
    %v1883 = vunpack.c.l.b16 %v1555
    %v1884 = vunpack.c.h.b16 %v1555
    %v1885 = vunpack.c.l.b16 %v1556
    %v1886 = vunpack.c.h.b16 %v1556
    %v1887 = vunpack.c.l.b16 %v1557
    %v1888 = vunpack.c.h.b16 %v1557
    %v1889 = vunpack.c.l.b16 %v1558
    %v1890 = vunpack.c.h.b16 %v1558
    %v1891 = vunpack.c.l.b16 %v1559
    %v1892 = vunpack.c.h.b16 %v1559
    %v1893 = vunpack.c.l.b16 %v1560
    %v1894 = vunpack.c.h.b16 %v1560
    %v1895 = vunpack.c.l.b16 %v1561
    %v1896 = vunpack.c.h.b16 %v1561
    %v1897 = vunpack.c.l.b16 %v1562
    %v1898 = vunpack.c.h.b16 %v1562
    %v1899 = vunpack.c.l.b16 %v1563
    %v1900 = vunpack.c.h.b16 %v1563
    %v1901 = vunpack.c.l.b16 %v1564
    %v1902 = vunpack.c.h.b16 %v1564
    %v1903 = vunpack.c.l.b16 %v1565
    %v1904 = vunpack.c.h.b16 %v1565
    %v1905 = vunpack.c.l.b16 %v1566
    %v1906 = vunpack.c.h.b16 %v1566
    %v1907 = vunpack.c.l.b16 %v1567
    %v1908 = vunpack.c.h.b16 %v1567
    %v1909 = vunpack.c.l.b16 %v1568
    %v1910 = vunpack.c.h.b16 %v1568
    %v1911 = vunpack.c.l.b16 %v1569
    %v1912 = vunpack.c.h.b16 %v1569
    %v1913 = vunpack.c.l.b16 %v1570
    %v1914 = vunpack.c.h.b16 %v1570
    %v1915 = vunpack.c.l.b16 %v1571
    %v1916 = vunpack.c.h.b16 %v1571
    %v1917 = vunpack.c.l.b16 %v1572
    %v1918 = vunpack.c.h.b16 %v1572
    %v1919 = vunpack.c.l.b16 %v1573
    %v1920 = vunpack.c.h.b16 %v1573
    %v1921 = vunpack.c.l.b16 %v1574
    %v1922 = vunpack.c.h.b16 %v1574
    %v1923 = vunpack.c.l.b16 %v1575
    %v1924 = vunpack.c.h.b16 %v1575
    %v1925 = vunpack.c.l.b16 %v1576
    %v1926 = vunpack.c.h.b16 %v1576
    %v1927 = vunpack.c.l.b16 %v1577
    %v1928 = vunpack.c.h.b16 %v1577
    %v1929 = vunpack.c.l.b16 %v1578
    %v1930 = vunpack.c.h.b16 %v1578
    %v1931 = vunpack.c.l.b16 %v1579
    %v1932 = vunpack.c.h.b16 %v1579
    %v1933 = vunpack.c.l.b16 %v1580
    %v1934 = vunpack.c.h.b16 %v1580
    %v1935 = vunpack.c.l.b16 %v1581
    %v1936 = vunpack.c.h.b16 %v1581
    %v1937 = vunpack.c.l.b16 %v1582
    %v1938 = vunpack.c.h.b16 %v1582
    %v1939 = vunpack.c.l.b16 %v1583
    %v1940 = vunpack.c.h.b16 %v1583
    %v1941 = vunpack.c.l.b16 %v1584
    %v1942 = vunpack.c.h.b16 %v1584
    %v1943 = vunpack.c.l.b16 %v1585
    %v1944 = vunpack.c.h.b16 %v1585
    %v1945 = vunpack.c.l.b16 %v1586
    %v1946 = vunpack.c.h.b16 %v1586
    %v1947 = vunpack.c.l.b16 %v1587
    %v1948 = vunpack.c.h.b16 %v1587
    %v1949 = vunpack.c.l.b16 %v1588
    %v1950 = vunpack.c.h.b16 %v1588
    %v1951 = vunpack.c.l.b16 %v1589
    %v1952 = vunpack.c.h.b16 %v1589
    %v1953 = vunpack.c.l.b16 %v1590
    %v1954 = vunpack.c.h.b16 %v1590
    %v1955 = vunpack.c.l.b16 %v1591
    %v1956 = vunpack.c.h.b16 %v1591
    %v1957 = vunpack.c.l.b16 %v1592
    %v1958 = vunpack.c.h.b16 %v1592
    %v1959 = vunpack.c.l.b16 %v1593
    %v1960 = vunpack.c.h.b16 %v1593
    %v1961 = vunpack.c.l.b16 %v1594
    %v1962 = vunpack.c.h.b16 %v1594
    %v1963 = vunpack.c.l.b16 %v1595
    %v1964 = vunpack.c.h.b16 %v1595
    %v1965 = vunpack.c.l.b16 %v1596
    %v1966 = vunpack.c.h.b16 %v1596
    %v1967 = vunpack.c.l.b16 %v1597
    %v1968 = vunpack.c.h.b16 %v1597
    %v1969 = vunpack.c.l.b16 %v1598
    %v1970 = vunpack.c.h.b16 %v1598
    %v1971 = vunpack.c.l.b16 %v1599
    %v1972 = vunpack.c.h.b16 %v1599
    %v1973 = vunpack.c.l.b16 %v1600
    %v1974 = vunpack.c.h.b16 %v1600
    %v1975 = vunpack.c.l.b16 %v1601
    %v1976 = vunpack.c.h.b16 %v1601
    %v1977 = vunpack.c.l.b16 %v1602
    %v1978 = vunpack.c.h.b16 %v1602
    %v1979 = vunpack.c.l.b16 %v1603
    %v1980 = vunpack.c.h.b16 %v1603
    %v1981 = vunpack.c.l.b16 %v1604
    %v1982 = vunpack.c.h.b16 %v1604
    %v1983 = vunpack.c.l.b16 %v1605
    %v1984 = vunpack.c.h.b16 %v1605
    %v1985 = vunpack.c.l.b16 %v1606
    %v1986 = vunpack.c.h.b16 %v1606
    %v1987 = vunpack.c.l.b16 %v1607
    %v1988 = vunpack.c.h.b16 %v1607
    %v1989 = vunpack.c.l.b16 %v1608
    %v1990 = vunpack.c.h.b16 %v1608
    %v1991 = vunpack.c.l.b16 %v1609
    %v1992 = vunpack.c.h.b16 %v1609
    %v1993 = vunpack.c.l.b16 %v1610
    %v1994 = vunpack.c.h.b16 %v1610
    %v1995 = vpack.c.b16 %v1755, %v1739
    %v1996 = vpack.c.b16 %v1756, %v1740
    %v1997 = vpack.c.b16 %v1757, %v1741
    %v1998 = vpack.c.b16 %v1758, %v1742
    %v1999 = vpack.c.b16 %v1759, %v1743
    %v2000 = vpack.c.b16 %v1760, %v1744
    %v2001 = vpack.c.b16 %v1761, %v1745
    %v2002 = vpack.c.b16 %v1762, %v1746
    %v2003 = vpack.c.b16 %v1763, %v1747
    %v2004 = vpack.c.b16 %v1764, %v1748
    %v2005 = vpack.c.b16 %v1765, %v1749
    %v2006 = vpack.c.b16 %v1766, %v1750
    %v2007 = vpack.c.b16 %v1767, %v1751
    %v2008 = vpack.c.b16 %v1768, %v1752
    %v2009 = vpack.c.b16 %v1769, %v1753
    %v2010 = vpack.c.b16 %v1770, %v1754
    %v2011 = vpack.c.b16 %v1787, %v1771
    %v2012 = vpack.c.b16 %v1788, %v1772
    %v2013 = vpack.c.b16 %v1789, %v1773
    %v2014 = vpack.c.b16 %v1790, %v1774
    %v2015 = vpack.c.b16 %v1791, %v1775
    %v2016 = vpack.c.b16 %v1792, %v1776
    %v2017 = vpack.c.b16 %v1793, %v1777
    %v2018 = vpack.c.b16 %v1794, %v1778
    %v2019 = vpack.c.b16 %v1795, %v1779
    %v2020 = vpack.c.b16 %v1796, %v1780
    %v2021 = vpack.c.b16 %v1797, %v1781
    %v2022 = vpack.c.b16 %v1798, %v1782
    %v2023 = vpack.c.b16 %v1799, %v1783
    %v2024 = vpack.c.b16 %v1800, %v1784
    %v2025 = vpack.c.b16 %v1801, %v1785
    %v2026 = vpack.c.b16 %v1802, %v1786
    %v2027 = vpack.c.b16 %v1819, %v1803
    %v2028 = vpack.c.b16 %v1820, %v1804
    %v2029 = vpack.c.b16 %v1821, %v1805
    %v2030 = vpack.c.b16 %v1822, %v1806
    %v2031 = vpack.c.b16 %v1823, %v1807
    %v2032 = vpack.c.b16 %v1824, %v1808
    %v2033 = vpack.c.b16 %v1825, %v1809
    %v2034 = vpack.c.b16 %v1826, %v1810
    %v2035 = vpack.c.b16 %v1827, %v1811
    %v2036 = vpack.c.b16 %v1828, %v1812
    %v2037 = vpack.c.b16 %v1829, %v1813
    %v2038 = vpack.c.b16 %v1830, %v1814
    %v2039 = vpack.c.b16 %v1831, %v1815
    %v2040 = vpack.c.b16 %v1832, %v1816
    %v2041 = vpack.c.b16 %v1833, %v1817
    %v2042 = vpack.c.b16 %v1834, %v1818
    %v2043 = vpack.c.b16 %v1851, %v1835
    %v2044 = vpack.c.b16 %v1852, %v1836
    %v2045 = vpack.c.b16 %v1853, %v1837
    %v2046 = vpack.c.b16 %v1854, %v1838
    %v2047 = vpack.c.b16 %v1855, %v1839
    %v2048 = vpack.c.b16 %v1856, %v1840
    %v2049 = vpack.c.b16 %v1857, %v1841
    %v2050 = vpack.c.b16 %v1858, %v1842
    %v2051 = vpack.c.b16 %v1859, %v1843
    %v2052 = vpack.c.b16 %v1860, %v1844
    %v2053 = vpack.c.b16 %v1861, %v1845
    %v2054 = vpack.c.b16 %v1862, %v1846
    %v2055 = vpack.c.b16 %v1863, %v1847
    %v2056 = vpack.c.b16 %v1864, %v1848
    %v2057 = vpack.c.b16 %v1865, %v1849
    %v2058 = vpack.c.b16 %v1866, %v1850
    %v2059 = vpack.c.b16 %v1883, %v1867
    %v2060 = vpack.c.b16 %v1884, %v1868
    %v2061 = vpack.c.b16 %v1885, %v1869
    %v2062 = vpack.c.b16 %v1886, %v1870
    %v2063 = vpack.c.b16 %v1887, %v1871
    %v2064 = vpack.c.b16 %v1888, %v1872
    %v2065 = vpack.c.b16 %v1889, %v1873
    %v2066 = vpack.c.b16 %v1890, %v1874
    %v2067 = vpack.c.b16 %v1891, %v1875
    %v2068 = vpack.c.b16 %v1892, %v1876
    %v2069 = vpack.c.b16 %v1893, %v1877
    %v2070 = vpack.c.b16 %v1894, %v1878
    %v2071 = vpack.c.b16 %v1895, %v1879
    %v2072 = vpack.c.b16 %v1896, %v1880
    %v2073 = vpack.c.b16 %v1897, %v1881
    %v2074 = vpack.c.b16 %v1898, %v1882
    %v2075 = vpack.c.b16 %v1915, %v1899
    %v2076 = vpack.c.b16 %v1916, %v1900
    %v2077 = vpack.c.b16 %v1917, %v1901
    %v2078 = vpack.c.b16 %v1918, %v1902
    %v2079 = vpack.c.b16 %v1919, %v1903
    %v2080 = vpack.c.b16 %v1920, %v1904
    %v2081 = vpack.c.b16 %v1921, %v1905
    %v2082 = vpack.c.b16 %v1922, %v1906
    %v2083 = vpack.c.b16 %v1923, %v1907
    %v2084 = vpack.c.b16 %v1924, %v1908
    %v2085 = vpack.c.b16 %v1925, %v1909
    %v2086 = vpack.c.b16 %v1926, %v1910
    %v2087 = vpack.c.b16 %v1927, %v1911
    %v2088 = vpack.c.b16 %v1928, %v1912
    %v2089 = vpack.c.b16 %v1929, %v1913
    %v2090 = vpack.c.b16 %v1930, %v1914
    %v2091 = vpack.c.b16 %v1947, %v1931
    %v2092 = vpack.c.b16 %v1948, %v1932
    %v2093 = vpack.c.b16 %v1949, %v1933
    %v2094 = vpack.c.b16 %v1950, %v1934
    %v2095 = vpack.c.b16 %v1951, %v1935
    %v2096 = vpack.c.b16 %v1952, %v1936
    %v2097 = vpack.c.b16 %v1953, %v1937
    %v2098 = vpack.c.b16 %v1954, %v1938
    %v2099 = vpack.c.b16 %v1955, %v1939
    %v2100 = vpack.c.b16 %v1956, %v1940
    %v2101 = vpack.c.b16 %v1957, %v1941
    %v2102 = vpack.c.b16 %v1958, %v1942
    %v2103 = vpack.c.b16 %v1959, %v1943
    %v2104 = vpack.c.b16 %v1960, %v1944
    %v2105 = vpack.c.b16 %v1961, %v1945
    %v2106 = vpack.c.b16 %v1962, %v1946
    %v2107 = vpack.c.b16 %v1979, %v1963
    %v2108 = vpack.c.b16 %v1980, %v1964
    %v2109 = vpack.c.b16 %v1981, %v1965
    %v2110 = vpack.c.b16 %v1982, %v1966
    %v2111 = vpack.c.b16 %v1983, %v1967
    %v2112 = vpack.c.b16 %v1984, %v1968
    %v2113 = vpack.c.b16 %v1985, %v1969
    %v2114 = vpack.c.b16 %v1986, %v1970
    %v2115 = vpack.c.b16 %v1987, %v1971
    %v2116 = vpack.c.b16 %v1988, %v1972
    %v2117 = vpack.c.b16 %v1989, %v1973
    %v2118 = vpack.c.b16 %v1990, %v1974
    %v2119 = vpack.c.b16 %v1991, %v1975
    %v2120 = vpack.c.b16 %v1992, %v1976
    %v2121 = vpack.c.b16 %v1993, %v1977
    %v2122 = vpack.c.b16 %v1994, %v1978
    %2251 = vmatpush.bf16.msra.mxu0 %v2107
    %2252 = vmatpush.bf16.msra.mxu0 %v2091
    %2253 = vmatpush.bf16.msra.mxu0 %v2075
    %2254 = vmatpush.bf16.msra.mxu0 %v2059
    %2255 = vmatpush.bf16.msra.mxu0 %v2043
    %2256 = vmatpush.bf16.msra.mxu0 %v2027
    %2257 = vmatpush.bf16.msra.mxu0 %v2011
    %2258 = vmatpush.bf16.msra.mxu0 %v1995
    %2259 = vmatmul.bf16.gmra.mxu0 %v1482
    %v2260 = vpop.f32.mrf.mxu0
    %v2261 = vadd.f32 0.0, %v2260
    %v2262 = vpop.f32.mrf.mxu0
    %2263 = vdwg.mxu0
    %2264 = vmatpush.bf16.msra.mxu0 %v2108
    %2265 = vmatpush.bf16.msra.mxu0 %v2092
    %2266 = vmatpush.bf16.msra.mxu0 %v2076
    %2267 = vmatpush.bf16.msra.mxu0 %v2060
    %2268 = vmatpush.bf16.msra.mxu0 %v2044
    %2269 = vmatpush.bf16.msra.mxu0 %v2028
    %2270 = vmatpush.bf16.msra.mxu0 %v2012
    %2271 = vmatpush.bf16.msra.mxu0 %v1996
    %2272 = vmatmul.bf16.gmra.mxu0 %v1482
    %v2273 = vpop.f32.mrf.mxu0
    %v2274 = vadd.f32 0.0, %v2273
    %v2275 = vpop.f32.mrf.mxu0
    %2276 = vdwg.mxu0
    %2277 = vmatpush.bf16.msra.mxu0 %v2109
    %2278 = vmatpush.bf16.msra.mxu0 %v2093
    %2279 = vmatpush.bf16.msra.mxu0 %v2077
    %2280 = vmatpush.bf16.msra.mxu0 %v2061
    %2281 = vmatpush.bf16.msra.mxu0 %v2045
    %2282 = vmatpush.bf16.msra.mxu0 %v2029
    %2283 = vmatpush.bf16.msra.mxu0 %v2013
    %2284 = vmatpush.bf16.msra.mxu0 %v1997
    %2285 = vmatmul.bf16.gmra.mxu0 %v1482
    %v2286 = vpop.f32.mrf.mxu0
    %v2287 = vadd.f32 0.0, %v2286
    %v2288 = vpop.f32.mrf.mxu0
    %2289 = vdwg.mxu0
    %2290 = vmatpush.bf16.msra.mxu0 %v2110
    %2291 = vmatpush.bf16.msra.mxu0 %v2094
    %2292 = vmatpush.bf16.msra.mxu0 %v2078
    %2293 = vmatpush.bf16.msra.mxu0 %v2062
    %2294 = vmatpush.bf16.msra.mxu0 %v2046
    %2295 = vmatpush.bf16.msra.mxu0 %v2030
    %2296 = vmatpush.bf16.msra.mxu0 %v2014
    %2297 = vmatpush.bf16.msra.mxu0 %v1998
    %2298 = vmatmul.bf16.gmra.mxu0 %v1482
    %v2299 = vpop.f32.mrf.mxu0
    %v2300 = vadd.f32 0.0, %v2299
    %v2301 = vpop.f32.mrf.mxu0
    %2302 = vdwg.mxu0
    %2303 = vmatpush.bf16.msra.mxu0 %v2111
    %2304 = vmatpush.bf16.msra.mxu0 %v2095
    %2305 = vmatpush.bf16.msra.mxu0 %v2079
    %2306 = vmatpush.bf16.msra.mxu0 %v2063
    %2307 = vmatpush.bf16.msra.mxu0 %v2047
    %2308 = vmatpush.bf16.msra.mxu0 %v2031
    %2309 = vmatpush.bf16.msra.mxu0 %v2015
    %2310 = vmatpush.bf16.msra.mxu0 %v1999
    %2311 = vmatmul.bf16.gmra.mxu0 %v1482
    %v2312 = vpop.f32.mrf.mxu0
    %v2313 = vadd.f32 0.0, %v2312
    %v2314 = vpop.f32.mrf.mxu0
    %2315 = vdwg.mxu0
    %2316 = vmatpush.bf16.msra.mxu0 %v2112
    %2317 = vmatpush.bf16.msra.mxu0 %v2096
    %2318 = vmatpush.bf16.msra.mxu0 %v2080
    %2319 = vmatpush.bf16.msra.mxu0 %v2064
    %2320 = vmatpush.bf16.msra.mxu0 %v2048
    %2321 = vmatpush.bf16.msra.mxu0 %v2032
    %2322 = vmatpush.bf16.msra.mxu0 %v2016
    %2323 = vmatpush.bf16.msra.mxu0 %v2000
    %2324 = vmatmul.bf16.gmra.mxu0 %v1482
    %v2325 = vpop.f32.mrf.mxu0
    %v2326 = vadd.f32 0.0, %v2325
    %v2327 = vpop.f32.mrf.mxu0
    %2328 = vdwg.mxu0
    %2329 = vmatpush.bf16.msra.mxu0 %v2113
    %2330 = vmatpush.bf16.msra.mxu0 %v2097
    %2331 = vmatpush.bf16.msra.mxu0 %v2081
    %2332 = vmatpush.bf16.msra.mxu0 %v2065
    %2333 = vmatpush.bf16.msra.mxu0 %v2049
    %2334 = vmatpush.bf16.msra.mxu0 %v2033
    %2335 = vmatpush.bf16.msra.mxu0 %v2017
    %2336 = vmatpush.bf16.msra.mxu0 %v2001
    %2337 = vmatmul.bf16.gmra.mxu0 %v1482
    %v2338 = vpop.f32.mrf.mxu0
    %v2339 = vadd.f32 0.0, %v2338
    %v2340 = vpop.f32.mrf.mxu0
    %2341 = vdwg.mxu0
    %2342 = vmatpush.bf16.msra.mxu0 %v2114
    %2343 = vmatpush.bf16.msra.mxu0 %v2098
    %2344 = vmatpush.bf16.msra.mxu0 %v2082
    %2345 = vmatpush.bf16.msra.mxu0 %v2066
    %2346 = vmatpush.bf16.msra.mxu0 %v2050
    %2347 = vmatpush.bf16.msra.mxu0 %v2034
    %2348 = vmatpush.bf16.msra.mxu0 %v2018
    %2349 = vmatpush.bf16.msra.mxu0 %v2002
    %2350 = vmatmul.bf16.gmra.mxu0 %v1482
    %v2351 = vpop.f32.mrf.mxu0
    %v2352 = vadd.f32 0.0, %v2351
    %v2353 = vpop.f32.mrf.mxu0
    %2354 = vdwg.mxu0
    %2355 = vmatpush.bf16.msra.mxu0 %v2115
    %2356 = vmatpush.bf16.msra.mxu0 %v2099
    %2357 = vmatpush.bf16.msra.mxu0 %v2083
    %2358 = vmatpush.bf16.msra.mxu0 %v2067
    %2359 = vmatpush.bf16.msra.mxu0 %v2051
    %2360 = vmatpush.bf16.msra.mxu0 %v2035
    %2361 = vmatpush.bf16.msra.mxu0 %v2019
    %2362 = vmatpush.bf16.msra.mxu0 %v2003
    %2363 = vmatmul.bf16.gmra.mxu0 %v1482
    %v2364 = vpop.f32.mrf.mxu0
    %v2365 = vadd.f32 0.0, %v2364
    %v2366 = vpop.f32.mrf.mxu0
    %2367 = vdwg.mxu0
    %2368 = vmatpush.bf16.msra.mxu0 %v2116
    %2369 = vmatpush.bf16.msra.mxu0 %v2100
    %2370 = vmatpush.bf16.msra.mxu0 %v2084
    %2371 = vmatpush.bf16.msra.mxu0 %v2068
    %2372 = vmatpush.bf16.msra.mxu0 %v2052
    %2373 = vmatpush.bf16.msra.mxu0 %v2036
    %2374 = vmatpush.bf16.msra.mxu0 %v2020
    %2375 = vmatpush.bf16.msra.mxu0 %v2004
    %2376 = vmatmul.bf16.gmra.mxu0 %v1482
    %v2377 = vpop.f32.mrf.mxu0
    %v2378 = vadd.f32 0.0, %v2377
    %v2379 = vpop.f32.mrf.mxu0
    %2380 = vdwg.mxu0
    %2381 = vmatpush.bf16.msra.mxu0 %v2117
    %2382 = vmatpush.bf16.msra.mxu0 %v2101
    %2383 = vmatpush.bf16.msra.mxu0 %v2085
    %2384 = vmatpush.bf16.msra.mxu0 %v2069
    %2385 = vmatpush.bf16.msra.mxu0 %v2053
    %2386 = vmatpush.bf16.msra.mxu0 %v2037
    %2387 = vmatpush.bf16.msra.mxu0 %v2021
    %2388 = vmatpush.bf16.msra.mxu0 %v2005
    %2389 = vmatmul.bf16.gmra.mxu0 %v1482
    %v2390 = vpop.f32.mrf.mxu0
    %v2391 = vadd.f32 0.0, %v2390
    %v2392 = vpop.f32.mrf.mxu0
    %2393 = vdwg.mxu0
    %2394 = vmatpush.bf16.msra.mxu0 %v2118
    %2395 = vmatpush.bf16.msra.mxu0 %v2102
    %2396 = vmatpush.bf16.msra.mxu0 %v2086
    %2397 = vmatpush.bf16.msra.mxu0 %v2070
    %2398 = vmatpush.bf16.msra.mxu0 %v2054
    %2399 = vmatpush.bf16.msra.mxu0 %v2038
    %2400 = vmatpush.bf16.msra.mxu0 %v2022
    %2401 = vmatpush.bf16.msra.mxu0 %v2006
    %2402 = vmatmul.bf16.gmra.mxu0 %v1482
    %v2403 = vpop.f32.mrf.mxu0
    %v2404 = vadd.f32 0.0, %v2403
    %v2405 = vpop.f32.mrf.mxu0
    %2406 = vdwg.mxu0
    %2407 = vmatpush.bf16.msra.mxu0 %v2119
    %2408 = vmatpush.bf16.msra.mxu0 %v2103
    %2409 = vmatpush.bf16.msra.mxu0 %v2087
    %2410 = vmatpush.bf16.msra.mxu0 %v2071
    %2411 = vmatpush.bf16.msra.mxu0 %v2055
    %2412 = vmatpush.bf16.msra.mxu0 %v2039
    %2413 = vmatpush.bf16.msra.mxu0 %v2023
    %2414 = vmatpush.bf16.msra.mxu0 %v2007
    %2415 = vmatmul.bf16.gmra.mxu0 %v1482
    %v2416 = vpop.f32.mrf.mxu0
    %v2417 = vadd.f32 0.0, %v2416
    %v2418 = vpop.f32.mrf.mxu0
    %2419 = vdwg.mxu0
    %2420 = vmatpush.bf16.msra.mxu0 %v2120
    %2421 = vmatpush.bf16.msra.mxu0 %v2104
    %2422 = vmatpush.bf16.msra.mxu0 %v2088
    %2423 = vmatpush.bf16.msra.mxu0 %v2072
    %2424 = vmatpush.bf16.msra.mxu0 %v2056
    %2425 = vmatpush.bf16.msra.mxu0 %v2040
    %2426 = vmatpush.bf16.msra.mxu0 %v2024
    %2427 = vmatpush.bf16.msra.mxu0 %v2008
    %2428 = vmatmul.bf16.gmra.mxu0 %v1482
    %v2429 = vpop.f32.mrf.mxu0
    %v2430 = vadd.f32 0.0, %v2429
    %v2431 = vpop.f32.mrf.mxu0
    %2432 = vdwg.mxu0
    %2433 = vmatpush.bf16.msra.mxu0 %v2121
    %2434 = vmatpush.bf16.msra.mxu0 %v2105
    %2435 = vmatpush.bf16.msra.mxu0 %v2089
    %2436 = vmatpush.bf16.msra.mxu0 %v2073
    %2437 = vmatpush.bf16.msra.mxu0 %v2057
    %2438 = vmatpush.bf16.msra.mxu0 %v2041
    %2439 = vmatpush.bf16.msra.mxu0 %v2025
    %2440 = vmatpush.bf16.msra.mxu0 %v2009
    %2441 = vmatmul.bf16.gmra.mxu0 %v1482
    %v2442 = vpop.f32.mrf.mxu0
    %v2443 = vadd.f32 0.0, %v2442
    %v2444 = vpop.f32.mrf.mxu0
    %2445 = vdwg.mxu0
    %2446 = vmatpush.bf16.msra.mxu0 %v2122
    %2447 = vmatpush.bf16.msra.mxu0 %v2106
    %2448 = vmatpush.bf16.msra.mxu0 %v2090
    %2449 = vmatpush.bf16.msra.mxu0 %v2074
    %2450 = vmatpush.bf16.msra.mxu0 %v2058
    %2451 = vmatpush.bf16.msra.mxu0 %v2042
    %2452 = vmatpush.bf16.msra.mxu0 %v2026
    %2453 = vmatpush.bf16.msra.mxu0 %v2010
    %2454 = vmatmul.bf16.gmra.mxu0 %v1482
    %v2455 = vpop.f32.mrf.mxu0
    %v2456 = vadd.f32 0.0, %v2455
    %v2457 = vpop.f32.mrf.mxu0
    %2458 = vdwg.mxu0
    %v2475 = vrot.slane %v2274, 6
    %v2476 = vrot.slane %v2287, 4
    %v2477 = vrot.slane %v2300, 2
    %v2478 = vrot.slane %v2326, 6
    %v2479 = vrot.slane %v2339, 4
    %v2480 = vrot.slane %v2352, 2
    %v2481 = vrot.slane %v2378, 6
    %v2482 = vrot.slane %v2391, 4
    %v2483 = vrot.slane %v2404, 2
    %v2484 = vrot.slane %v2430, 6
    %v2485 = vrot.slane %v2443, 4
    %v2486 = vrot.slane %v2456, 2
    %vm2487 = vcmask 1041408
    %v2488 = vsel %vm2487, %v2261, %v2475
    %vm2489 = vcmask 1045508
    %v2490 = vsel %vm2489, %v2476, %v2477
    %vm2491 = vcmask 1043456
    %v2492 = vsel %vm2491, %v2488, %v2490
    %v2493 = vsel %vm2487, %v2313, %v2478
    %v2494 = vsel %vm2489, %v2479, %v2480
    %v2495 = vsel %vm2491, %v2493, %v2494
    %v2496 = vsel %vm2487, %v2365, %v2481
    %v2497 = vsel %vm2489, %v2482, %v2483
    %v2498 = vsel %vm2491, %v2496, %v2497
    %v2499 = vsel %vm2487, %v2417, %v2484
    %v2500 = vsel %vm2489, %v2485, %v2486
    %v2501 = vsel %vm2491, %v2499, %v2500
    %2506 = vst [vmem:[#allocation2] sm:$0xff] %v2492
    %2507 = vst [vmem:[#allocation2 + $0x8] sm:$0xff] %v2495
    %2508 = vst [vmem:[#allocation2 + $0x10] sm:$0xff] %v2498
    %2509 = vst [vmem:[#allocation2 + $0x18] sm:$0xff] %v2501
    // Predicated region
    $region18: #{feature_extractor_forward.1} parent=1 // pred_check
      _
    $region19: #{feature_extractor_forward.1} parent=1 // pred_check_branch
      %2511 = sbr.rel (0) target = $region21
    $region20: #{feature_extractor_forward.1} parent=1 // pred_region
      %2513 = vsyncadd [#allocation3], 0
      %s2515 = sshll.u32 [#allocation2], 4
      %s2516 = int_to_ptr.vmem [resolvable:$true] %s2515
      %s2517 = sshll.u32 %s4, 4
      %s2518 = int_to_ptr.hbm [resolvable:$true] %s2517
      %2520 = dma.vmem_to_hbm [thread:$0]  %s2516, 512, %s2518, [#allocation3]
    $region21: #{feature_extractor_forward.1} parent=1 // pred_fallthru
      _
    // Predicated region
    $region22: #{feature_extractor_forward.1} parent=1 // pred_check
      _
    $region23: #{feature_extractor_forward.1} parent=1 // pred_check_branch
      %2522 = sbr.rel (0) target = $region25
    $region24: #{feature_extractor_forward.1} parent=1 // pred_region
      %2524 = dma.done [#allocation3], 512
    $region25: #{feature_extractor_forward.1} parent=1 // pred_fallthru
      _
    %2525 = vsyncpa [#allocation3], 1

</llo_original>
